<compile_context>
chip_gen: v6e
topology: v6e:2x2x1
jax: 0.10.0
libtpu: 0.0.40
codegen_flags: <defaults>
</compile_context>

<pallas_src>
import math
import functools

import jax
import jax.numpy as jnp
from jax import lax
from jax.experimental import pallas as pl
from jax.experimental.pallas import tpu as pltpu


def _layernorm(x, gamma, beta, eps):
    u = jnp.mean(x, axis=-1, keepdims=True)
    s = jnp.mean((x - u) ** 2, axis=-1, keepdims=True)
    return gamma * ((x - u) * lax.rsqrt(s + eps)) + beta


def _gelu_exact(x):
    # PyTorch nn.GELU() default: exact erf-based GELU.
    return 0.5 * x * (1.0 + lax.erf(x * 0.7071067811865476))


def block_kernel(
    xq_ref, xf_ref, mask_ref,
    wq_ref, bq_ref, wk_ref, bk_ref, wv_ref, bv_ref,
    wp_ref, bp_ref, g1_ref, be1_ref,
    w1_ref, b1_ref, w2_ref, b2_ref,
    g2_ref, be2_ref,
    o_ref,
    k_sc, v_sc,
    *, eps,
):
    n_heads = k_sc.shape[0]

    # --- K / V for the whole sequence: computed once per batch row (first query tile),
    #     carried across query tiles in bf16 VMEM scratch.  K is kept in its natural
    #     (H, W, S) layout; V is transposed ONCE here to (H, S, W) so the per-tile PV
    #     contraction is a plain batched A.B. ---
    @pl.when(pl.program_id(1) == 0)
    def _():
        xf = xf_ref[0]                                              # (S, D) bf16 (host-cast)
        k = jnp.einsum("hdw,sd->hws", wk_ref[...], xf,
                       preferred_element_type=jnp.float32) + bk_ref[...]
        v = jnp.einsum("hdw,sd->hws", wv_ref[...], xf,
                       preferred_element_type=jnp.float32) + bv_ref[...]
        k_sc[...] = k.astype(jnp.bfloat16)                          # (H, W, S)
        v_sc[...] = jnp.swapaxes(v, 1, 2).astype(jnp.bfloat16)      # (H, S, W)

    xq = xq_ref[0]                                                  # (TQ, D) f32 (residual)

    # Q projection (head-major); 1/sqrt(W) already folded into wq/bq on the host.
    q = jnp.einsum("hdw,qd->hwq", wq_ref[...], xq.astype(jnp.bfloat16),
                   preferred_element_type=jnp.float32) + bq_ref[...]    # (H, W, TQ)
    q = jnp.swapaxes(q, 1, 2).astype(jnp.bfloat16)                      # (H, TQ, W)

    # Scores: plain batched matmul (lhs contracting last, rhs contracting second-to-last).
    scores = jnp.einsum("hqw,hwk->hqk", q, k_sc[...],
                        preferred_element_type=jnp.float32)             # (H, TQ, S)
    scores = scores + mask_ref[0]                                       # mask pre-scaled host-side
    scores = scores - jnp.max(scores, axis=-1, keepdims=True)
    p = jnp.exp(scores)
    p = p * pl.reciprocal(jnp.sum(p, axis=-1, keepdims=True), approx=True)

    # PV: plain batched matmul.
    attn = jnp.einsum("hqk,hkw->hqw", p.astype(jnp.bfloat16), v_sc[...],
                      preferred_element_type=jnp.float32)               # (H, TQ, W)

    # Merge heads along the lane axis (== torch transpose+view) and apply the output
    # projection as ONE full-depth (TQ, D) x (D, D) matmul (fused proj + head-sum).
    merged = jnp.concatenate([attn[h] for h in range(n_heads)], axis=-1)  # (TQ, D)
    proj = jnp.dot(merged.astype(jnp.bfloat16), wp_ref[...],
                   preferred_element_type=jnp.float32) + bp_ref[...]      # (TQ, D)

    # Residual + LayerNorm 1.
    h1 = _layernorm(xq + proj, g1_ref[...], be1_ref[...], eps)

    # Position-wise feed-forward + residual + LayerNorm 2.
    ff = jnp.dot(h1.astype(jnp.bfloat16), w1_ref[...],
                 preferred_element_type=jnp.float32) + b1_ref[...]
    ff = _gelu_exact(ff)
    ff = jnp.dot(ff.astype(jnp.bfloat16), w2_ref[...],
                 preferred_element_type=jnp.float32) + b2_ref[...]
    out = _layernorm(h1 + ff, g2_ref[...], be2_ref[...], eps)

    o_ref[0] = out.astype(o_ref.dtype)


def _vmem_capacity_bytes():
    try:
        return int(pltpu.get_tpu_info().vmem_capacity_bytes)
    except Exception:
        return 128 * 1024 * 1024


def _choose_tq(S, max_tq):
    # Largest query tile (multiple of 8, <= max_tq) that divides S; else the full sequence.
    for cand in (512, 256, 128, 64, 32, 16, 8):
        if cand <= max_tq and cand <= S and S % cand == 0:
            return cand
    return S


def _estimate_vmem_bytes(S, D, F, H, W, TQ):
    bf, f4 = 2, 4
    weights = (3 * H * D * W * bf + 3 * H * W * f4           # q/k/v weights (bf16) + biases
               + D * D * bf + D * f4                          # output projection
               + D * F * bf + F * f4 + F * D * bf + D * f4    # FFN
               + 4 * D * f4)                                  # layernorm params
    streams = 2 * (TQ * D * f4 + S * D * bf + S * f4 + TQ * D * f4)   # double-buffered I/O
    scratch = 2 * H * W * S * bf                              # K/V scratch
    temps = (2 * H * TQ * S * f4                              # scores + p
             + H * TQ * W * f4 + 2 * TQ * D * f4              # attn + merged/proj
             + 2 * TQ * F * f4                                # FFN activations
             + 4 * TQ * D * f4)                               # residual / LN temporaries
    return weights + streams + scratch + temps


def transformer_block(x, mask, params, *, n_heads, eps=1e-12):
    """x: (B, S, D) float32, mask: (B, S) float32 (1 = attend, 0 = masked)."""
    B, S, D = x.shape
    W = D // n_heads
    F = params["w1"].shape[1]
    scale = 1.0 / math.sqrt(W)

    vmem_cap = _vmem_capacity_bytes()
    # Generation-aware query tile: larger on 128-MiB-VMEM parts (v5e/v6e), smaller on v7x.
    max_tq = 512 if vmem_cap >= 96 * 1024 * 1024 else 128
    TQ = _choose_tq(S, max_tq)
    n_qt = S // TQ

    # Key mask pre-scaled on the host: kernel just adds it to the scores.
    mask_add = (-10000.0 * (1.0 - mask.astype(jnp.float32))).reshape(B, 1, S)

    # Full-sequence activations shipped bf16 (K/V build DMA halved); query tile stays f32.
    x_bf16 = x.astype(jnp.bfloat16)

    # Head-major Q/K/V weight layouts prepared host-side; output projection stays (D, D) 2-D
    # (the head merge happens in-kernel so the projection is a single full-depth matmul).
    def head_major(w):                       # (D, H*W) -> (H, D, W)
        return jnp.transpose(w.reshape(D, n_heads, W), (1, 0, 2))

    bf16 = jnp.bfloat16
    wq_h = (head_major(params["wq"]) * scale).astype(bf16)          # 1/sqrt(W) folded into Q
    wk_h = head_major(params["wk"]).astype(bf16)
    wv_h = head_major(params["wv"]).astype(bf16)
    bq_h = (params["bq"].reshape(n_heads, W, 1) * scale).astype(jnp.float32)
    bk_h = params["bk"].reshape(n_heads, W, 1).astype(jnp.float32)
    bv_h = params["bv"].reshape(n_heads, W, 1).astype(jnp.float32)
    wp2d = params["wp"].astype(bf16)                                 # (D, D)
    w1 = params["w1"].astype(bf16)
    w2 = params["w2"].astype(bf16)

    param_list = [
        wq_h, bq_h, wk_h, bk_h, wv_h, bv_h,
        wp2d, params["bp"], params["g1"], params["be1"],
        w1, params["b1"], w2, params["b2"],
        params["g2"], params["be2"],
    ]

    def weight_spec(arr):
        nd = arr.ndim
        idx = lambda b, qi, _nd=nd: (0,) * _nd
        try:
            # Grid-invariant parameters -> single VMEM buffer (halves weight footprint).
            return pl.BlockSpec(arr.shape, idx, pipeline_mode=pl.Buffered(1))
        except TypeError:
            return pl.BlockSpec(arr.shape, idx)

    in_specs = [
        pl.BlockSpec((1, TQ, D), lambda b, qi: (b, qi, 0)),         # query tile of x (f32)
        pl.BlockSpec((1, S, D), lambda b, qi: (b, 0, 0)),           # full-sequence x (bf16, K/V)
        pl.BlockSpec((1, 1, S), lambda b, qi: (b, 0, 0)),           # pre-scaled key mask
    ] + [weight_spec(p) for p in param_list]

    vmem_limit = int(min(
        max(32 * 1024 * 1024,
            int(1.5 * _estimate_vmem_bytes(S, D, F, n_heads, W, TQ))),
        int(0.85 * vmem_cap)))

    kernel = functools.partial(block_kernel, eps=eps)

    return pl.pallas_call(
        kernel,
        out_shape=jax.ShapeDtypeStruct((B, S, D), jnp.float32),
        grid_spec=pltpu.PrefetchScalarGridSpec(
            num_scalar_prefetch=0,
            grid=(B, n_qt),
            in_specs=in_specs,
            out_specs=pl.BlockSpec((1, TQ, D), lambda b, qi: (b, qi, 0)),
            scratch_shapes=[
                pltpu.VMEM((n_heads, W, S), jnp.bfloat16),          # K (H, W, S)
                pltpu.VMEM((n_heads, S, W), jnp.bfloat16),          # V (H, S, W)
            ],
        ),
        compiler_params=pltpu.CompilerParams(
            # Batch axis feeds megacore; query-tile axis is "arbitrary" because the
            # K/V scratch is carried across it.
            dimension_semantics=("parallel", "arbitrary"),
            vmem_limit_bytes=vmem_limit,
        ),
    )(x, x_bf16, mask_add, *param_list)


def init_params(key, dim, dim_ff):
    ks = jax.random.split(key, 8)
    sd = 0.02

    def lin(k, fan_in, fan_out):
        kw, kb = jax.random.split(k)
        w = jax.random.normal(kw, (fan_in, fan_out), jnp.float32) * sd
        b = jax.random.normal(kb, (1, fan_out), jnp.float32) * sd
        return w, b

    wq, bq = lin(ks[0], dim, dim)
    wk, bk = lin(ks[1], dim, dim)
    wv, bv = lin(ks[2], dim, dim)
    wp, bp = lin(ks[3], dim, dim)
    w1, b1 = lin(ks[4], dim, dim_ff)
    w2, b2 = lin(ks[5], dim_ff, dim)
    return dict(
        wq=wq, bq=bq, wk=wk, bk=bk, wv=wv, bv=bv,
        wp=wp, bp=bp,
        g1=jnp.ones((1, dim), jnp.float32), be1=jnp.zeros((1, dim), jnp.float32),
        w1=w1, b1=b1, w2=w2, b2=b2,
        g2=jnp.ones((1, dim), jnp.float32), be2=jnp.zeros((1, dim), jnp.float32),
    )


def reference_block(x, mask, params, *, n_heads, eps=1e-12):
    """Pure-JAX f32 reference mirroring the PyTorch Block forward (eval mode)."""
    B, S, D = x.shape
    W = D // n_heads
    q = x @ params["wq"] + params["bq"][0]
    k = x @ params["wk"] + params["bk"][0]
    v = x @ params["wv"] + params["bv"][0]

    def split(t):  # (B,S,D) -> (B,H,S,W)
        return t.reshape(B, S, n_heads, W).transpose(0, 2, 1, 3)

    q, k, v = split(q), split(k), split(v)
    scores = jnp.einsum("bhsw,bhtw->bhst", q, k) / math.sqrt(W)
    scores = scores - 10000.0 * (1.0 - mask[:, None, None, :])
    p = jax.nn.softmax(scores, axis=-1)
    h = jnp.einsum("bhst,bhtw->bhsw", p, v).transpose(0, 2, 1, 3).reshape(B, S, D)
    proj = h @ params["wp"] + params["bp"][0]

    def ln(t, g, b):
        u = t.mean(-1, keepdims=True)
        s = ((t - u) ** 2).mean(-1, keepdims=True)
        return g[0] * ((t - u) / jnp.sqrt(s + eps)) + b[0]

    h1 = ln(x + proj, params["g1"], params["be1"])
    ff = jax.nn.gelu(h1 @ params["w1"] + params["b1"][0], approximate=False)
    ff = ff @ params["w2"] + params["b2"][0]
    return ln(h1 + ff, params["g2"], params["be2"])


if __name__ == "__main__":
    B, S, D, F, H = 2, 8, 32, 64, 4   # dim=32, dim_ff=64, n_heads=4 (small synthetic shapes)
    key = jax.random.PRNGKey(0)
    kx, km, kp = jax.random.split(key, 3)

    x = jax.random.normal(kx, (B, S, D), jnp.float32)
    # binary mask: 1 = attend, 0 = masked-out key positions
    mask = (jax.random.uniform(km, (B, S)) > 0.2).astype(jnp.float32)
    params = init_params(kp, D, F)

    out = transformer_block(x, mask, params, n_heads=H)
    out = jax.block_until_ready(out)

    ref = reference_block(x, mask, params, n_heads=H)
    assert out.shape == (B, S, D)
    # bf16 matmul inputs (f32 accumulation) vs. pure-f32 reference -> loosened tolerance.
    max_err = float(jnp.max(jnp.abs(out - ref)))
    assert jnp.allclose(out, ref, atol=1e-2, rtol=1e-2), max_err
    print("KERNEL_OK")
</pallas_src>

<mosaic_0001>
module attributes {stable_mosaic.version = 11 : i64} {
  func.func @block_kernel(%arg0: i32, %arg1: i32, %arg2: memref<1x8x32xf32, #tpu.memory_space<vmem>>, %arg3: memref<1x8x32xbf16, #tpu.memory_space<vmem>>, %arg4: memref<1x1x8xf32, #tpu.memory_space<vmem>>, %arg5: memref<4x32x8xbf16, #tpu.memory_space<vmem>>, %arg6: memref<4x8x1xf32, #tpu.memory_space<vmem>>, %arg7: memref<4x32x8xbf16, #tpu.memory_space<vmem>>, %arg8: memref<4x8x1xf32, #tpu.memory_space<vmem>>, %arg9: memref<4x32x8xbf16, #tpu.memory_space<vmem>>, %arg10: memref<4x8x1xf32, #tpu.memory_space<vmem>>, %arg11: memref<32x32xbf16, #tpu.memory_space<vmem>>, %arg12: memref<1x32xf32, #tpu.memory_space<vmem>>, %arg13: memref<1x32xf32, #tpu.memory_space<vmem>>, %arg14: memref<1x32xf32, #tpu.memory_space<vmem>>, %arg15: memref<32x64xbf16, #tpu.memory_space<vmem>>, %arg16: memref<1x64xf32, #tpu.memory_space<vmem>>, %arg17: memref<64x32xbf16, #tpu.memory_space<vmem>>, %arg18: memref<1x32xf32, #tpu.memory_space<vmem>>, %arg19: memref<1x32xf32, #tpu.memory_space<vmem>>, %arg20: memref<1x32xf32, #tpu.memory_space<vmem>>, %arg21: memref<1x8x32xf32, #tpu.memory_space<vmem>>, %arg22: memref<4x8x8xbf16, #tpu.memory_space<vmem>>, %arg23: memref<4x8x8xbf16, #tpu.memory_space<vmem>>) attributes {dimension_semantics = [#tpu.dimension_semantics<parallel>, #tpu.dimension_semantics<arbitrary>], iteration_bounds = array<i64: 2, 1>, scalar_prefetch = 0 : i64, scratch_operands = 2 : i64, tpu.core_type = #tpu.core_type<tc>, window_params = [{transform_indices = @transform_0, window_bounds = array<i64: 1, 8, 32>}, {transform_indices = @transform_1, window_bounds = array<i64: 1, 8, 32>}, {transform_indices = @transform_2, window_bounds = array<i64: 1, 1, 8>}, {pipeline_mode = #tpu.pipeline_mode<synchronous>, transform_indices = @transform_3, window_bounds = array<i64: 4, 32, 8>}, {pipeline_mode = #tpu.pipeline_mode<synchronous>, transform_indices = @transform_4, window_bounds = array<i64: 4, 8, 1>}, {pipeline_mode = #tpu.pipeline_mode<synchronous>, transform_indices = @transform_5, window_bounds = array<i64: 4, 32, 8>}, {pipeline_mode = #tpu.pipeline_mode<synchronous>, transform_indices = @transform_6, window_bounds = array<i64: 4, 8, 1>}, {pipeline_mode = #tpu.pipeline_mode<synchronous>, transform_indices = @transform_7, window_bounds = array<i64: 4, 32, 8>}, {pipeline_mode = #tpu.pipeline_mode<synchronous>, transform_indices = @transform_8, window_bounds = array<i64: 4, 8, 1>}, {pipeline_mode = #tpu.pipeline_mode<synchronous>, transform_indices = @transform_9, window_bounds = array<i64: 32, 32>}, {pipeline_mode = #tpu.pipeline_mode<synchronous>, transform_indices = @transform_10, window_bounds = array<i64: 1, 32>}, {pipeline_mode = #tpu.pipeline_mode<synchronous>, transform_indices = @transform_11, window_bounds = array<i64: 1, 32>}, {pipeline_mode = #tpu.pipeline_mode<synchronous>, transform_indices = @transform_12, window_bounds = array<i64: 1, 32>}, {pipeline_mode = #tpu.pipeline_mode<synchronous>, transform_indices = @transform_13, window_bounds = array<i64: 32, 64>}, {pipeline_mode = #tpu.pipeline_mode<synchronous>, transform_indices = @transform_14, window_bounds = array<i64: 1, 64>}, {pipeline_mode = #tpu.pipeline_mode<synchronous>, transform_indices = @transform_15, window_bounds = array<i64: 64, 32>}, {pipeline_mode = #tpu.pipeline_mode<synchronous>, transform_indices = @transform_16, window_bounds = array<i64: 1, 32>}, {pipeline_mode = #tpu.pipeline_mode<synchronous>, transform_indices = @transform_17, window_bounds = array<i64: 1, 32>}, {pipeline_mode = #tpu.pipeline_mode<synchronous>, transform_indices = @transform_18, window_bounds = array<i64: 1, 32>}, {transform_indices = @transform_19, window_bounds = array<i64: 1, 8, 32>}]} {
    %c0_i32 = arith.constant 0 : i32
    %0 = arith.cmpi eq, %arg1, %c0_i32 : i32
    %1 = arith.extui %0 : i1 to i32
    %c0_i32_0 = arith.constant 0 : i32
    %2 = arith.cmpi ne, %1, %c0_i32_0 : i32
    scf.if %2 {
      %c0_61 = arith.constant 0 : index
      %c0_62 = arith.constant 0 : index
      %c0_63 = arith.constant 0 : index
      %121 = vector.load %arg3[%c0_61, %c0_62, %c0_63] : memref<1x8x32xbf16, #tpu.memory_space<vmem>>, vector<1x8x32xbf16>
      %122 = vector.shape_cast %121 : vector<1x8x32xbf16> to vector<8x32xbf16>
      %c0_64 = arith.constant 0 : index
      %c0_65 = arith.constant 0 : index
      %c0_66 = arith.constant 0 : index
      %123 = vector.load %arg7[%c0_64, %c0_65, %c0_66] : memref<4x32x8xbf16, #tpu.memory_space<vmem>>, vector<4x32x8xbf16>
      "tpu.trace_start"() <{level = 10 : i32, message = "hdw,sd->hws"}> : () -> ()
      %cst_67 = arith.constant dense<0.000000e+00> : vector<4x8x8xf32>
      %124 = tpu.matmul %123, %122, %cst_67 {dimension_numbers = #tpu.dot_dimension_numbers<[1], [1], [0, 2], [0], [0, 0, 0, 2, 1, 0], [], []>} : vector<4x32x8xbf16>, vector<8x32xbf16>, vector<4x8x8xf32> -> vector<4x8x8xf32>
      "tpu.trace_stop"() : () -> ()
      %c0_68 = arith.constant 0 : index
      %c0_69 = arith.constant 0 : index
      %c0_70 = arith.constant 0 : index
      %125 = vector.load %arg8[%c0_68, %c0_69, %c0_70] : memref<4x8x1xf32, #tpu.memory_space<vmem>>, vector<4x8x1xf32>
      %126 = vector.broadcast %125 : vector<4x8x1xf32> to vector<4x8x8xf32>
      %127 = arith.addf %124, %126 : vector<4x8x8xf32>
      %c0_71 = arith.constant 0 : index
      %c0_72 = arith.constant 0 : index
      %c0_73 = arith.constant 0 : index
      %128 = vector.load %arg9[%c0_71, %c0_72, %c0_73] : memref<4x32x8xbf16, #tpu.memory_space<vmem>>, vector<4x32x8xbf16>
      "tpu.trace_start"() <{level = 10 : i32, message = "hdw,sd->hws"}> : () -> ()
      %cst_74 = arith.constant dense<0.000000e+00> : vector<4x8x8xf32>
      %129 = tpu.matmul %128, %122, %cst_74 {dimension_numbers = #tpu.dot_dimension_numbers<[1], [1], [0, 2], [0], [0, 0, 0, 2, 1, 0], [], []>} : vector<4x32x8xbf16>, vector<8x32xbf16>, vector<4x8x8xf32> -> vector<4x8x8xf32>
      "tpu.trace_stop"() : () -> ()
      %c0_75 = arith.constant 0 : index
      %c0_76 = arith.constant 0 : index
      %c0_77 = arith.constant 0 : index
      %130 = vector.load %arg10[%c0_75, %c0_76, %c0_77] : memref<4x8x1xf32, #tpu.memory_space<vmem>>, vector<4x8x1xf32>
      %131 = vector.broadcast %130 : vector<4x8x1xf32> to vector<4x8x8xf32>
      %132 = arith.addf %129, %131 : vector<4x8x8xf32>
      %133 = arith.truncf %127 : vector<4x8x8xf32> to vector<4x8x8xbf16>
      %c0_78 = arith.constant 0 : index
      %c0_79 = arith.constant 0 : index
      %c0_80 = arith.constant 0 : index
      %134 = vector.load %arg22[%c0_78, %c0_79, %c0_80] : memref<4x8x8xbf16, #tpu.memory_space<vmem>>, vector<4x8x8xbf16>
      tpu.vector_store %arg22[%c0_78, %c0_79, %c0_80], %133 {strides = array<i32>} : memref<4x8x8xbf16, #tpu.memory_space<vmem>>, vector<4x8x8xbf16>,
      %135 = tpu.transpose %132, [0, 2, 1] : vector<4x8x8xf32> -> vector<4x8x8xf32>
      %136 = arith.truncf %135 : vector<4x8x8xf32> to vector<4x8x8xbf16>
      %c0_81 = arith.constant 0 : index
      %c0_82 = arith.constant 0 : index
      %c0_83 = arith.constant 0 : index
      %137 = vector.load %arg23[%c0_81, %c0_82, %c0_83] : memref<4x8x8xbf16, #tpu.memory_space<vmem>>, vector<4x8x8xbf16>
      tpu.vector_store %arg23[%c0_81, %c0_82, %c0_83], %136 {strides = array<i32>} : memref<4x8x8xbf16, #tpu.memory_space<vmem>>, vector<4x8x8xbf16>,
    } else {
    }
    %c0 = arith.constant 0 : index
    %c0_1 = arith.constant 0 : index
    %c0_2 = arith.constant 0 : index
    %3 = vector.load %arg2[%c0, %c0_1, %c0_2] : memref<1x8x32xf32, #tpu.memory_space<vmem>>, vector<1x8x32xf32>
    %4 = vector.shape_cast %3 : vector<1x8x32xf32> to vector<8x32xf32>
    %c0_3 = arith.constant 0 : index
    %c0_4 = arith.constant 0 : index
    %c0_5 = arith.constant 0 : index
    %5 = vector.load %arg5[%c0_3, %c0_4, %c0_5] : memref<4x32x8xbf16, #tpu.memory_space<vmem>>, vector<4x32x8xbf16>
    %6 = arith.truncf %4 : vector<8x32xf32> to vector<8x32xbf16>
    "tpu.trace_start"() <{level = 10 : i32, message = "hdw,qd->hwq"}> : () -> ()
    %cst = arith.constant dense<0.000000e+00> : vector<4x8x8xf32>
    %7 = tpu.matmul %5, %6, %cst {dimension_numbers = #tpu.dot_dimension_numbers<[1], [1], [0, 2], [0], [0, 0, 0, 2, 1, 0], [], []>} : vector<4x32x8xbf16>, vector<8x32xbf16>, vector<4x8x8xf32> -> vector<4x8x8xf32>
    "tpu.trace_stop"() : () -> ()
    %c0_6 = arith.constant 0 : index
    %c0_7 = arith.constant 0 : index
    %c0_8 = arith.constant 0 : index
    %8 = vector.load %arg6[%c0_6, %c0_7, %c0_8] : memref<4x8x1xf32, #tpu.memory_space<vmem>>, vector<4x8x1xf32>
    %9 = vector.broadcast %8 : vector<4x8x1xf32> to vector<4x8x8xf32>
    %10 = arith.addf %7, %9 : vector<4x8x8xf32>
    %11 = tpu.transpose %10, [0, 2, 1] : vector<4x8x8xf32> -> vector<4x8x8xf32>
    %12 = arith.truncf %11 : vector<4x8x8xf32> to vector<4x8x8xbf16>
    %c0_9 = arith.constant 0 : index
    %c0_10 = arith.constant 0 : index
    %c0_11 = arith.constant 0 : index
    %13 = vector.load %arg22[%c0_9, %c0_10, %c0_11] : memref<4x8x8xbf16, #tpu.memory_space<vmem>>, vector<4x8x8xbf16>
    "tpu.trace_start"() <{level = 10 : i32, message = "hqw,hwk->hqk"}> : () -> ()
    %cst_12 = arith.constant dense<0.000000e+00> : vector<4x8x8xf32>
    %14 = tpu.matmul %12, %13, %cst_12 {dimension_numbers = #tpu.dot_dimension_numbers<[2], [1], [1], [2], [0, 0, 0, 1, 1, 2], [0], [0]>} : vector<4x8x8xbf16>, vector<4x8x8xbf16>, vector<4x8x8xf32> -> vector<4x8x8xf32>
    "tpu.trace_stop"() : () -> ()
    %c0_13 = arith.constant 0 : index
    %c0_14 = arith.constant 0 : index
    %c0_15 = arith.constant 0 : index
    %15 = vector.load %arg4[%c0_13, %c0_14, %c0_15] : memref<1x1x8xf32, #tpu.memory_space<vmem>>, vector<1x1x8xf32>
    %16 = vector.shape_cast %15 : vector<1x1x8xf32> to vector<1x8xf32>
    %17 = vector.shape_cast %16 : vector<1x8xf32> to vector<1x1x8xf32>
    %18 = vector.broadcast %17 : vector<1x1x8xf32> to vector<4x8x8xf32>
    %19 = arith.addf %14, %18 : vector<4x8x8xf32>
    %cst_16 = arith.constant dense<0xFF800000> : vector<4x8xf32>
    %20 = vector.multi_reduction <maximumf>, %19, %cst_16 [2] : vector<4x8x8xf32> to vector<4x8xf32>
    %21 = vector.shape_cast %20 : vector<4x8xf32> to vector<4x8x1xf32>
    %22 = vector.broadcast %21 : vector<4x8x1xf32> to vector<4x8x8xf32>
    %23 = arith.subf %19, %22 : vector<4x8x8xf32>
    %24 = math.exp %23 : vector<4x8x8xf32>
    %cst_17 = arith.constant dense<0.000000e+00> : vector<4x8xf32>
    %25 = vector.multi_reduction <add>, %24, %cst_17 [2] : vector<4x8x8xf32> to vector<4x8xf32>
    %26 = vector.shape_cast %25 : vector<4x8xf32> to vector<4x8x1xf32>
    %27 = tpu.reciprocal %26 {approx = true} : vector<4x8x1xf32> -> vector<4x8x1xf32>
    %28 = vector.broadcast %27 : vector<4x8x1xf32> to vector<4x8x8xf32>
    %29 = arith.mulf %24, %28 : vector<4x8x8xf32>
    %30 = arith.truncf %29 : vector<4x8x8xf32> to vector<4x8x8xbf16>
    %c0_18 = arith.constant 0 : index
    %c0_19 = arith.constant 0 : index
    %c0_20 = arith.constant 0 : index
    %31 = vector.load %arg23[%c0_18, %c0_19, %c0_20] : memref<4x8x8xbf16, #tpu.memory_space<vmem>>, vector<4x8x8xbf16>
    "tpu.trace_start"() <{level = 10 : i32, message = "hqk,hkw->hqw"}> : () -> ()
    %cst_21 = arith.constant dense<0.000000e+00> : vector<4x8x8xf32>
    %32 = tpu.matmul %30, %31, %cst_21 {dimension_numbers = #tpu.dot_dimension_numbers<[2], [1], [1], [2], [0, 0, 0, 1, 1, 2], [0], [0]>} : vector<4x8x8xbf16>, vector<4x8x8xbf16>, vector<4x8x8xf32> -> vector<4x8x8xf32>
    "tpu.trace_stop"() : () -> ()
    %33 = vector.extract_strided_slice %32 {offsets = [0, 0, 0], sizes = [1, 8, 8], strides = [1, 1, 1]} : vector<4x8x8xf32> to vector<1x8x8xf32>
    %34 = vector.shape_cast %33 : vector<1x8x8xf32> to vector<8x8xf32>
    %35 = vector.extract_strided_slice %32 {offsets = [1, 0, 0], sizes = [1, 8, 8], strides = [1, 1, 1]} : vector<4x8x8xf32> to vector<1x8x8xf32>
    %36 = vector.shape_cast %35 : vector<1x8x8xf32> to vector<8x8xf32>
    %37 = vector.extract_strided_slice %32 {offsets = [2, 0, 0], sizes = [1, 8, 8], strides = [1, 1, 1]} : vector<4x8x8xf32> to vector<1x8x8xf32>
    %38 = vector.shape_cast %37 : vector<1x8x8xf32> to vector<8x8xf32>
    %39 = vector.extract_strided_slice %32 {offsets = [3, 0, 0], sizes = [1, 8, 8], strides = [1, 1, 1]} : vector<4x8x8xf32> to vector<1x8x8xf32>
    %40 = vector.shape_cast %39 : vector<1x8x8xf32> to vector<8x8xf32>
    %41 = tpu.concatenate %34, %36, %38, %40 in 1 : vector<8x8xf32>, vector<8x8xf32>, vector<8x8xf32>, vector<8x8xf32> -> vector<8x32xf32>
    %42 = arith.truncf %41 : vector<8x32xf32> to vector<8x32xbf16>
    %c0_22 = arith.constant 0 : index
    %c0_23 = arith.constant 0 : index
    %43 = vector.load %arg11[%c0_22, %c0_23] : memref<32x32xbf16, #tpu.memory_space<vmem>>, vector<32x32xbf16>
    %cst_24 = arith.constant dense<0.000000e+00> : vector<8x32xf32>
    %44 = tpu.matmul %42, %43, %cst_24 {dimension_numbers = #tpu.dot_dimension_numbers<[1], [0], [0], [1], [0, 0, 1, 1], [], []>} : vector<8x32xbf16>, vector<32x32xbf16>, vector<8x32xf32> -> vector<8x32xf32>
    %c0_25 = arith.constant 0 : index
    %c0_26 = arith.constant 0 : index
    %45 = vector.load %arg12[%c0_25, %c0_26] : memref<1x32xf32, #tpu.memory_space<vmem>>, vector<1x32xf32>
    %46 = vector.broadcast %45 : vector<1x32xf32> to vector<8x32xf32>
    %47 = arith.addf %44, %46 : vector<8x32xf32>
    %48 = arith.addf %4, %47 : vector<8x32xf32>
    %c0_27 = arith.constant 0 : index
    %c0_28 = arith.constant 0 : index
    %49 = vector.load %arg13[%c0_27, %c0_28] : memref<1x32xf32, #tpu.memory_space<vmem>>, vector<1x32xf32>
    %c0_29 = arith.constant 0 : index
    %c0_30 = arith.constant 0 : index
    %50 = vector.load %arg14[%c0_29, %c0_30] : memref<1x32xf32, #tpu.memory_space<vmem>>, vector<1x32xf32>
    %cst_31 = arith.constant dense<0.000000e+00> : vector<8xf32>
    %51 = vector.multi_reduction <add>, %48, %cst_31 [1] : vector<8x32xf32> to vector<8xf32>
    %52 = vector.shape_cast %51 : vector<8xf32> to vector<8x1xf32>
    %cst_32 = arith.constant 3.200000e+01 : f32
    %53 = vector.broadcast %cst_32 : f32 to vector<8x1xf32>
    %54 = arith.divf %52, %53 : vector<8x1xf32>
    %55 = vector.broadcast %54 : vector<8x1xf32> to vector<8x32xf32>
    %56 = arith.subf %48, %55 : vector<8x32xf32>
    %57 = arith.mulf %56, %56 : vector<8x32xf32>
    %cst_33 = arith.constant dense<0.000000e+00> : vector<8xf32>
    %58 = vector.multi_reduction <add>, %57, %cst_33 [1] : vector<8x32xf32> to vector<8xf32>
    %59 = vector.shape_cast %58 : vector<8xf32> to vector<8x1xf32>
    %cst_34 = arith.constant 3.200000e+01 : f32
    %60 = vector.broadcast %cst_34 : f32 to vector<8x1xf32>
    %61 = arith.divf %59, %60 : vector<8x1xf32>
    %62 = vector.broadcast %54 : vector<8x1xf32> to vector<8x32xf32>
    %63 = arith.subf %48, %62 : vector<8x32xf32>
    %cst_35 = arith.constant 9.99999996E-13 : f32
    %64 = vector.broadcast %cst_35 : f32 to vector<8x1xf32>
    %65 = arith.addf %61, %64 : vector<8x1xf32>
    %66 = math.rsqrt %65 : vector<8x1xf32>
    %67 = vector.broadcast %66 : vector<8x1xf32> to vector<8x32xf32>
    %68 = arith.mulf %63, %67 : vector<8x32xf32>
    %69 = vector.broadcast %49 : vector<1x32xf32> to vector<8x32xf32>
    %70 = arith.mulf %69, %68 : vector<8x32xf32>
    %71 = vector.broadcast %50 : vector<1x32xf32> to vector<8x32xf32>
    %72 = arith.addf %70, %71 : vector<8x32xf32>
    %73 = arith.truncf %72 : vector<8x32xf32> to vector<8x32xbf16>
    %c0_36 = arith.constant 0 : index
    %c0_37 = arith.constant 0 : index
    %74 = vector.load %arg15[%c0_36, %c0_37] : memref<32x64xbf16, #tpu.memory_space<vmem>>, vector<32x64xbf16>
    %cst_38 = arith.constant dense<0.000000e+00> : vector<8x64xf32>
    %75 = tpu.matmul %73, %74, %cst_38 {dimension_numbers = #tpu.dot_dimension_numbers<[1], [0], [0], [1], [0, 0, 1, 1], [], []>} : vector<8x32xbf16>, vector<32x64xbf16>, vector<8x64xf32> -> vector<8x64xf32>
    %c0_39 = arith.constant 0 : index
    %c0_40 = arith.constant 0 : index
    %76 = vector.load %arg16[%c0_39, %c0_40] : memref<1x64xf32, #tpu.memory_space<vmem>>, vector<1x64xf32>
    %77 = vector.broadcast %76 : vector<1x64xf32> to vector<8x64xf32>
    %78 = arith.addf %75, %77 : vector<8x64xf32>
    %cst_41 = arith.constant 5.000000e-01 : f32
    %79 = vector.broadcast %cst_41 : f32 to vector<8x64xf32>
    %80 = arith.mulf %79, %78 : vector<8x64xf32>
    %cst_42 = arith.constant 0.707106769 : f32
    %81 = vector.broadcast %cst_42 : f32 to vector<8x64xf32>
    %82 = arith.mulf %78, %81 : vector<8x64xf32>
    %83 = math.erf %82 : vector<8x64xf32>
    %cst_43 = arith.constant 1.000000e+00 : f32
    %84 = vector.broadcast %cst_43 : f32 to vector<8x64xf32>
    %85 = arith.addf %84, %83 : vector<8x64xf32>
    %86 = arith.mulf %80, %85 : vector<8x64xf32>
    %87 = arith.truncf %86 : vector<8x64xf32> to vector<8x64xbf16>
    %c0_44 = arith.constant 0 : index
    %c0_45 = arith.constant 0 : index
    %88 = vector.load %arg17[%c0_44, %c0_45] : memref<64x32xbf16, #tpu.memory_space<vmem>>, vector<64x32xbf16>
    %cst_46 = arith.constant dense<0.000000e+00> : vector<8x32xf32>
    %89 = tpu.matmul %87, %88, %cst_46 {dimension_numbers = #tpu.dot_dimension_numbers<[1], [0], [0], [1], [0, 0, 1, 1], [], []>} : vector<8x64xbf16>, vector<64x32xbf16>, vector<8x32xf32> -> vector<8x32xf32>
    %c0_47 = arith.constant 0 : index
    %c0_48 = arith.constant 0 : index
    %90 = vector.load %arg18[%c0_47, %c0_48] : memref<1x32xf32, #tpu.memory_space<vmem>>, vector<1x32xf32>
    %91 = vector.broadcast %90 : vector<1x32xf32> to vector<8x32xf32>
    %92 = arith.addf %89, %91 : vector<8x32xf32>
    %93 = arith.addf %72, %92 : vector<8x32xf32>
    %c0_49 = arith.constant 0 : index
    %c0_50 = arith.constant 0 : index
    %94 = vector.load %arg19[%c0_49, %c0_50] : memref<1x32xf32, #tpu.memory_space<vmem>>, vector<1x32xf32>
    %c0_51 = arith.constant 0 : index
    %c0_52 = arith.constant 0 : index
    %95 = vector.load %arg20[%c0_51, %c0_52] : memref<1x32xf32, #tpu.memory_space<vmem>>, vector<1x32xf32>
    %cst_53 = arith.constant dense<0.000000e+00> : vector<8xf32>
    %96 = vector.multi_reduction <add>, %93, %cst_53 [1] : vector<8x32xf32> to vector<8xf32>
    %97 = vector.shape_cast %96 : vector<8xf32> to vector<8x1xf32>
    %cst_54 = arith.constant 3.200000e+01 : f32
    %98 = vector.broadcast %cst_54 : f32 to vector<8x1xf32>
    %99 = arith.divf %97, %98 : vector<8x1xf32>
    %100 = vector.broadcast %99 : vector<8x1xf32> to vector<8x32xf32>
    %101 = arith.subf %93, %100 : vector<8x32xf32>
    %102 = arith.mulf %101, %101 : vector<8x32xf32>
    %cst_55 = arith.constant dense<0.000000e+00> : vector<8xf32>
    %103 = vector.multi_reduction <add>, %102, %cst_55 [1] : vector<8x32xf32> to vector<8xf32>
    %104 = vector.shape_cast %103 : vector<8xf32> to vector<8x1xf32>
    %cst_56 = arith.constant 3.200000e+01 : f32
    %105 = vector.broadcast %cst_56 : f32 to vector<8x1xf32>
    %106 = arith.divf %104, %105 : vector<8x1xf32>
    %107 = vector.broadcast %99 : vector<8x1xf32> to vector<8x32xf32>
    %108 = arith.subf %93, %107 : vector<8x32xf32>
    %cst_57 = arith.constant 9.99999996E-13 : f32
    %109 = vector.broadcast %cst_57 : f32 to vector<8x1xf32>
    %110 = arith.addf %106, %109 : vector<8x1xf32>
    %111 = math.rsqrt %110 : vector<8x1xf32>
    %112 = vector.broadcast %111 : vector<8x1xf32> to vector<8x32xf32>
    %113 = arith.mulf %108, %112 : vector<8x32xf32>
    %114 = vector.broadcast %94 : vector<1x32xf32> to vector<8x32xf32>
    %115 = arith.mulf %114, %113 : vector<8x32xf32>
    %116 = vector.broadcast %95 : vector<1x32xf32> to vector<8x32xf32>
    %117 = arith.addf %115, %116 : vector<8x32xf32>
    %c0_58 = arith.constant 0 : index
    %c0_59 = arith.constant 0 : index
    %c0_60 = arith.constant 0 : index
    %118 = vector.load %arg21[%c0_58, %c0_59, %c0_60] : memref<1x8x32xf32, #tpu.memory_space<vmem>>, vector<1x8x32xf32>
    %119 = vector.shape_cast %118 : vector<1x8x32xf32> to vector<8x32xf32>
    %120 = vector.shape_cast %117 : vector<8x32xf32> to vector<1x8x32xf32>
    tpu.vector_store %arg21[%c0_58, %c0_59, %c0_60], %120 {strides = array<i32>} : memref<1x8x32xf32, #tpu.memory_space<vmem>>, vector<1x8x32xf32>,
    return
  }
  func.func @transform_0(%arg0: i32, %arg1: i32) -> (i32, i32, i32) {
    %c0_i32 = arith.constant 0 : i32
    %c0_i32_0 = arith.constant 0 : i32
    return %arg0, %arg1, %c0_i32 : i32, i32, i32
  }
  func.func @transform_1(%arg0: i32, %arg1: i32) -> (i32, i32, i32) {
    %c0_i32 = arith.constant 0 : i32
    %c0_i32_0 = arith.constant 0 : i32
    %c0_i32_1 = arith.constant 0 : i32
    return %arg0, %c0_i32, %c0_i32_0 : i32, i32, i32
  }
  func.func @transform_2(%arg0: i32, %arg1: i32) -> (i32, i32, i32) {
    %c0_i32 = arith.constant 0 : i32
    %c0_i32_0 = arith.constant 0 : i32
    %c0_i32_1 = arith.constant 0 : i32
    return %arg0, %c0_i32, %c0_i32_0 : i32, i32, i32
  }
  func.func @transform_3(%arg0: i32, %arg1: i32) -> (i32, i32, i32) {
    %c0_i32 = arith.constant 0 : i32
    %c0_i32_0 = arith.constant 0 : i32
    %c0_i32_1 = arith.constant 0 : i32
    %c0_i32_2 = arith.constant 0 : i32
    return %c0_i32, %c0_i32_0, %c0_i32_1 : i32, i32, i32
  }
  func.func @transform_4(%arg0: i32, %arg1: i32) -> (i32, i32, i32) {
    %c0_i32 = arith.constant 0 : i32
    %c0_i32_0 = arith.constant 0 : i32
    %c0_i32_1 = arith.constant 0 : i32
    %c0_i32_2 = arith.constant 0 : i32
    return %c0_i32, %c0_i32_0, %c0_i32_1 : i32, i32, i32
  }
  func.func @transform_5(%arg0: i32, %arg1: i32) -> (i32, i32, i32) {
    %c0_i32 = arith.constant 0 : i32
    %c0_i32_0 = arith.constant 0 : i32
    %c0_i32_1 = arith.constant 0 : i32
    %c0_i32_2 = arith.constant 0 : i32
    return %c0_i32, %c0_i32_0, %c0_i32_1 : i32, i32, i32
  }
  func.func @transform_6(%arg0: i32, %arg1: i32) -> (i32, i32, i32) {
    %c0_i32 = arith.constant 0 : i32
    %c0_i32_0 = arith.constant 0 : i32
    %c0_i32_1 = arith.constant 0 : i32
    %c0_i32_2 = arith.constant 0 : i32
    return %c0_i32, %c0_i32_0, %c0_i32_1 : i32, i32, i32
  }
  func.func @transform_7(%arg0: i32, %arg1: i32) -> (i32, i32, i32) {
    %c0_i32 = arith.constant 0 : i32
    %c0_i32_0 = arith.constant 0 : i32
    %c0_i32_1 = arith.constant 0 : i32
    %c0_i32_2 = arith.constant 0 : i32
    return %c0_i32, %c0_i32_0, %c0_i32_1 : i32, i32, i32
  }
  func.func @transform_8(%arg0: i32, %arg1: i32) -> (i32, i32, i32) {
    %c0_i32 = arith.constant 0 : i32
    %c0_i32_0 = arith.constant 0 : i32
    %c0_i32_1 = arith.constant 0 : i32
    %c0_i32_2 = arith.constant 0 : i32
    return %c0_i32, %c0_i32_0, %c0_i32_1 : i32, i32, i32
  }
  func.func @transform_9(%arg0: i32, %arg1: i32) -> (i32, i32) {
    %c0_i32 = arith.constant 0 : i32
    %c0_i32_0 = arith.constant 0 : i32
    %c0_i32_1 = arith.constant 0 : i32
    return %c0_i32, %c0_i32_0 : i32, i32
  }
  func.func @transform_10(%arg0: i32, %arg1: i32) -> (i32, i32) {
    %c0_i32 = arith.constant 0 : i32
    %c0_i32_0 = arith.constant 0 : i32
    %c0_i32_1 = arith.constant 0 : i32
    return %c0_i32, %c0_i32_0 : i32, i32
  }
  func.func @transform_11(%arg0: i32, %arg1: i32) -> (i32, i32) {
    %c0_i32 = arith.constant 0 : i32
    %c0_i32_0 = arith.constant 0 : i32
    %c0_i32_1 = arith.constant 0 : i32
    return %c0_i32, %c0_i32_0 : i32, i32
  }
  func.func @transform_12(%arg0: i32, %arg1: i32) -> (i32, i32) {
    %c0_i32 = arith.constant 0 : i32
    %c0_i32_0 = arith.constant 0 : i32
    %c0_i32_1 = arith.constant 0 : i32
    return %c0_i32, %c0_i32_0 : i32, i32
  }
  func.func @transform_13(%arg0: i32, %arg1: i32) -> (i32, i32) {
    %c0_i32 = arith.constant 0 : i32
    %c0_i32_0 = arith.constant 0 : i32
    %c0_i32_1 = arith.constant 0 : i32
    return %c0_i32, %c0_i32_0 : i32, i32
  }
  func.func @transform_14(%arg0: i32, %arg1: i32) -> (i32, i32) {
    %c0_i32 = arith.constant 0 : i32
    %c0_i32_0 = arith.constant 0 : i32
    %c0_i32_1 = arith.constant 0 : i32
    return %c0_i32, %c0_i32_0 : i32, i32
  }
  func.func @transform_15(%arg0: i32, %arg1: i32) -> (i32, i32) {
    %c0_i32 = arith.constant 0 : i32
    %c0_i32_0 = arith.constant 0 : i32
    %c0_i32_1 = arith.constant 0 : i32
    return %c0_i32, %c0_i32_0 : i32, i32
  }
  func.func @transform_16(%arg0: i32, %arg1: i32) -> (i32, i32) {
    %c0_i32 = arith.constant 0 : i32
    %c0_i32_0 = arith.constant 0 : i32
    %c0_i32_1 = arith.constant 0 : i32
    return %c0_i32, %c0_i32_0 : i32, i32
  }
  func.func @transform_17(%arg0: i32, %arg1: i32) -> (i32, i32) {
    %c0_i32 = arith.constant 0 : i32
    %c0_i32_0 = arith.constant 0 : i32
    %c0_i32_1 = arith.constant 0 : i32
    return %c0_i32, %c0_i32_0 : i32, i32
  }
  func.func @transform_18(%arg0: i32, %arg1: i32) -> (i32, i32) {
    %c0_i32 = arith.constant 0 : i32
    %c0_i32_0 = arith.constant 0 : i32
    %c0_i32_1 = arith.constant 0 : i32
    return %c0_i32, %c0_i32_0 : i32, i32
  }
  func.func @transform_19(%arg0: i32, %arg1: i32) -> (i32, i32, i32) {
    %c0_i32 = arith.constant 0 : i32
    %c0_i32_0 = arith.constant 0 : i32
    return %arg0, %arg1, %c0_i32 : i32, i32, i32
  }
}

</mosaic_0001>

<llo_original>
// kernel: tpu_custom_call.1
$region0: #{tpu_custom_call.1}
  #allocation0 [shape = 'u32[]', space=smem, size = 0x4, offset = 0x4, fixed_abs, tag = 'smem constant byte address 0x4 - core index']
  #allocation1 [shape = 'u32[144,128]{1,0:T(1,128)}', space=vmem, size = 0x12000, scoped, tag = 'internal scratch']
  #allocation2 [shape = 'bf16[4,8,8]{2,1,0:T(8,128)(2,1)}', space=vmem, size = 0x2000, scoped, tag = 'scratch operand']
  #allocation3 [shape = 'bf16[4,8,8]{2,1,0:T(8,128)(2,1)}', space=vmem, size = 0x2000, scoped, tag = 'scratch operand']
  %s0 = inlined_call_operand.vmem [shape: f32[2,8,32], index: 0, kind: input, shape index: {}]
  %s1 = inlined_call_operand.vmem [shape: bf16[2,8,32], index: 1, kind: input, shape index: {}]
  %s2 = inlined_call_operand.vmem [shape: f32[2,1,8], index: 2, kind: input, shape index: {}]
  %s3 = inlined_call_operand.vmem [shape: bf16[4,32,8], index: 3, kind: input, shape index: {}]
  %s4 = inlined_call_operand.vmem [shape: f32[4,8,1], index: 4, kind: input, shape index: {}]
  %s5 = inlined_call_operand.vmem [shape: bf16[4,32,8], index: 5, kind: input, shape index: {}]
  %s6 = inlined_call_operand.vmem [shape: f32[4,8,1], index: 6, kind: input, shape index: {}]
  %s7 = inlined_call_operand.vmem [shape: bf16[4,32,8], index: 7, kind: input, shape index: {}]
  %s8 = inlined_call_operand.vmem [shape: f32[4,8,1], index: 8, kind: input, shape index: {}]
  %s9 = inlined_call_operand.vmem [shape: bf16[32,32], index: 9, kind: input, shape index: {}]
  %s10 = inlined_call_operand.vmem [shape: f32[1,32], index: 10, kind: input, shape index: {}]
  %s11 = inlined_call_operand.vmem [shape: f32[1,32], index: 11, kind: input, shape index: {}]
  %s12 = inlined_call_operand.vmem [shape: f32[1,32], index: 12, kind: input, shape index: {}]
  %s13 = inlined_call_operand.vmem [shape: bf16[32,64], index: 13, kind: input, shape index: {}]
  %s14 = inlined_call_operand.vmem [shape: f32[1,64], index: 14, kind: input, shape index: {}]
  %s15 = inlined_call_operand.vmem [shape: bf16[64,32], index: 15, kind: input, shape index: {}]
  %s16 = inlined_call_operand.vmem [shape: f32[1,32], index: 16, kind: input, shape index: {}]
  %s17 = inlined_call_operand.vmem [shape: f32[1,32], index: 17, kind: input, shape index: {}]
  %s18 = inlined_call_operand.vmem [shape: f32[1,32], index: 18, kind: input, shape index: {}]
  %s19 = inlined_call_operand.hbm [shape: f32[2,8,32], index: 19, kind: output, shape index: {}]
  %s20 = sld [smem:[#allocation0]]
  $region113: #{tpu_custom_call.1} parent=0
    _
  %s22 = ssub.s32 1, %s20
  %s23 = scalar_select 0, %s22, %s20
  $region1: #{tpu_custom_call.1} parent=0
    #allocation4 [shape = 'u8[8192]{0}', space=vmem, size = 0x2000, scoped, tag = 'output window, operand 0']
    #allocation5 [shape = 's32[2]{0}', space=sflag, size = 0x8, scoped, tag = 'scoped memory for tpu_custom_call.1']
    %24 = vsyncpa [#allocation5], 0
    %s25 = scalar_lea.sflag [#allocation5], 1
    %26 = vsyncpa %s25, 0
    loop: start=0, step=1, limit=4
    $region2: #{tpu_custom_call.1} parent=1 // loop_pre_header
      _
    $region3: #{tpu_custom_call.1} parent=1 // loop_header
      %s28 = sphi 0, %s32
      %p29 = scmp.ge.s32.totalorder %s28, 4
      %s35 = sphi 0, %s47
      %s36 = sphi 0, %s43
      %s37 = sphi 0, %s35
      %s38 = sphi 0, %s36
      %s39 = sphi 0, %s37
      %s40 = sphi 0, %s38
      %s52 = sphi 0, %s54
      %s55 = sphi 0, %s52
      %s56 = sphi 0, %s55
      %s72 = sphi 0, %s56
      %s78 = sphi 0, %s80
      %s81 = sphi 0, %s78
      %s82 = sphi 0, %s81
      %s98 = sphi 0, %s82
      %s104 = sphi 0, %s106
      %s107 = sphi 0, %s104
      %s108 = sphi 0, %s107
      %s124 = sphi 0, %s108
      %s128 = sphi 0, %s128
      %s130 = sphi 0, %s128
      %s131 = sphi 0, %s130
      %s145 = sphi 0, %s131
      %s149 = sphi 0, %s149
      %s151 = sphi 0, %s149
      %s152 = sphi 0, %s151
      %s166 = sphi 0, %s152
      %s170 = sphi 0, %s170
      %s172 = sphi 0, %s170
      %s173 = sphi 0, %s172
      %s187 = sphi 0, %s173
      %s191 = sphi 0, %s191
      %s193 = sphi 0, %s191
      %s194 = sphi 0, %s193
      %s208 = sphi 0, %s194
      %s212 = sphi 0, %s212
      %s214 = sphi 0, %s212
      %s215 = sphi 0, %s214
      %s229 = sphi 0, %s215
      %s233 = sphi 0, %s233
      %s235 = sphi 0, %s233
      %s236 = sphi 0, %s235
      %s250 = sphi 0, %s236
      %s254 = sphi 0, %s254
      %s256 = sphi 0, %s254
      %s257 = sphi 0, %s256
      %s271 = sphi 0, %s257
      %s275 = sphi 0, %s275
      %s277 = sphi 0, %s275
      %s278 = sphi 0, %s277
      %s292 = sphi 0, %s278
      %s296 = sphi 0, %s296
      %s298 = sphi 0, %s296
      %s299 = sphi 0, %s298
      %s313 = sphi 0, %s299
      %s317 = sphi 0, %s317
      %s319 = sphi 0, %s317
      %s320 = sphi 0, %s319
      %s334 = sphi 0, %s320
      %s338 = sphi 0, %s338
      %s340 = sphi 0, %s338
      %s341 = sphi 0, %s340
      %s355 = sphi 0, %s341
      %s359 = sphi 0, %s359
      %s361 = sphi 0, %s359
      %s362 = sphi 0, %s361
      %s376 = sphi 0, %s362
      %s380 = sphi 0, %s380
      %s382 = sphi 0, %s380
      %s383 = sphi 0, %s382
      %s397 = sphi 0, %s383
      %s401 = sphi 0, %s401
      %s403 = sphi 0, %s401
      %s404 = sphi 0, %s403
      %s418 = sphi 0, %s404
      %s422 = sphi 0, %s422
      %s424 = sphi 0, %s422
      %s425 = sphi 0, %s424
      %s439 = sphi 0, %s425
      %s443 = sphi 0, %s443
      %s445 = sphi 0, %s443
      %s446 = sphi 0, %s445
      %s460 = sphi 0, %s446
      %s468 = sphi 0, %s470
      %s471 = sphi 0, %s468
      %s472 = sphi 0, %s471
      %s488 = sphi 0, %s472
    $region4: #{tpu_custom_call.1} parent=1 // loop_header_branch
      %31 = sbr.rel (%p29) target = $region8
    $region5: #{tpu_custom_call.1} parent=1 // loop_body
      %s33 = ssub.s32 %s28, 1
      %s34 = ssub.s32 %s28, 2
      %s41 = sadd.s32 1, %s36
      %p42 = scmp.ge.s32.totalorder %s41, 1
      %s43 = scalar_select %p42, 0, %s41
      %s44 = sadd.s32 1, %s35
      %s45 = scalar_select %p42, %s44, %s35
      %p46 = scmp.ge.s32.totalorder %s45, 2
      %s47 = scalar_select %p46, 0, %s45
      %s48 = ssub.s32 %s35, %s47
      %s49 = ssub.s32 %s36, %s43
      %s50 = sor.u32 %s48, %s49
      %p51 = scmp.eq.s32.totalorder %s50, 0
      %s53 = sadd.s32 %s52, 1
      %s54 = scalar_select %p51, %s52, %s53
      %p57 = pneg %p51
      %p58 = scmp.eq.s32.totalorder %s28, 1
      %p59 = por %p57, %p58
      %p60 = scmp.ne.s32.totalorder %s52, %s55
      %p61 = scmp.eq.s32.totalorder %s28, 0
      %p62 = por %p60, %p61
      %p63 = scmp.ne.s32.totalorder %s52, %s55
      %p64 = scmp.eq.s32.totalorder %s33, 1
      %p65 = por %p63, %p64
      %p66 = scmp.ne.s32.totalorder %s55, %s56
      %p67 = scmp.eq.s32.totalorder %s33, 0
      %p68 = por %p66, %p67
      %p69 = scmp.ne.s32.totalorder %s55, %s56
      %p70 = scmp.eq.s32.totalorder %s34, 1
      %p71 = por %p69, %p70
      %p73 = scmp.ne.s32.totalorder %s56, %s72
      %p74 = scmp.eq.s32.totalorder %s34, 0
      %p75 = por %p73, %p74
      %s76 = ssub.s32 %s35, %s47
      %p77 = scmp.eq.s32.totalorder %s76, 0
      %s79 = sadd.s32 %s78, 1
      %s80 = scalar_select %p77, %s78, %s79
      %p83 = pneg %p77
      %p84 = scmp.eq.s32.totalorder %s28, 1
      %p85 = por %p83, %p84
      %p86 = scmp.ne.s32.totalorder %s78, %s81
      %p87 = scmp.eq.s32.totalorder %s28, 0
      %p88 = por %p86, %p87
      %p89 = scmp.ne.s32.totalorder %s78, %s81
      %p90 = scmp.eq.s32.totalorder %s33, 1
      %p91 = por %p89, %p90
      %p92 = scmp.ne.s32.totalorder %s81, %s82
      %p93 = scmp.eq.s32.totalorder %s33, 0
      %p94 = por %p92, %p93
      %p95 = scmp.ne.s32.totalorder %s81, %s82
      %p96 = scmp.eq.s32.totalorder %s34, 1
      %p97 = por %p95, %p96
      %p99 = scmp.ne.s32.totalorder %s82, %s98
      %p100 = scmp.eq.s32.totalorder %s34, 0
      %p101 = por %p99, %p100
      %s102 = ssub.s32 %s35, %s47
      %p103 = scmp.eq.s32.totalorder %s102, 0
      %s105 = sadd.s32 %s104, 1
      %s106 = scalar_select %p103, %s104, %s105
      %p109 = pneg %p103
      %p110 = scmp.eq.s32.totalorder %s28, 1
      %p111 = por %p109, %p110
      %p112 = scmp.ne.s32.totalorder %s104, %s107
      %p113 = scmp.eq.s32.totalorder %s28, 0
      %p114 = por %p112, %p113
      %p115 = scmp.ne.s32.totalorder %s104, %s107
      %p116 = scmp.eq.s32.totalorder %s33, 1
      %p117 = por %p115, %p116
      %p118 = scmp.ne.s32.totalorder %s107, %s108
      %p119 = scmp.eq.s32.totalorder %s33, 0
      %p120 = por %p118, %p119
      %p121 = scmp.ne.s32.totalorder %s107, %s108
      %p122 = scmp.eq.s32.totalorder %s34, 1
      %p123 = por %p121, %p122
      %p125 = scmp.ne.s32.totalorder %s108, %s124
      %p126 = scmp.eq.s32.totalorder %s34, 0
      %p127 = por %p125, %p126
      %s129 = sadd.s32 %s128, 1
      %p132 = scmp.eq.s32.totalorder %s28, 1
      %p133 = scmp.ne.s32.totalorder %s128, %s130
      %p134 = scmp.eq.s32.totalorder %s28, 0
      %p135 = por %p133, %p134
      %p136 = scmp.ne.s32.totalorder %s128, %s130
      %p137 = scmp.eq.s32.totalorder %s33, 1
      %p138 = por %p136, %p137
      %p139 = scmp.ne.s32.totalorder %s130, %s131
      %p140 = scmp.eq.s32.totalorder %s33, 0
      %p141 = por %p139, %p140
      %p142 = scmp.ne.s32.totalorder %s130, %s131
      %p143 = scmp.eq.s32.totalorder %s34, 1
      %p144 = por %p142, %p143
      %p146 = scmp.ne.s32.totalorder %s131, %s145
      %p147 = scmp.eq.s32.totalorder %s34, 0
      %p148 = por %p146, %p147
      %s150 = sadd.s32 %s149, 1
      %p153 = scmp.eq.s32.totalorder %s28, 1
      %p154 = scmp.ne.s32.totalorder %s149, %s151
      %p155 = scmp.eq.s32.totalorder %s28, 0
      %p156 = por %p154, %p155
      %p157 = scmp.ne.s32.totalorder %s149, %s151
      %p158 = scmp.eq.s32.totalorder %s33, 1
      %p159 = por %p157, %p158
      %p160 = scmp.ne.s32.totalorder %s151, %s152
      %p161 = scmp.eq.s32.totalorder %s33, 0
      %p162 = por %p160, %p161
      %p163 = scmp.ne.s32.totalorder %s151, %s152
      %p164 = scmp.eq.s32.totalorder %s34, 1
      %p165 = por %p163, %p164
      %p167 = scmp.ne.s32.totalorder %s152, %s166
      %p168 = scmp.eq.s32.totalorder %s34, 0
      %p169 = por %p167, %p168
      %s171 = sadd.s32 %s170, 1
      %p174 = scmp.eq.s32.totalorder %s28, 1
      %p175 = scmp.ne.s32.totalorder %s170, %s172
      %p176 = scmp.eq.s32.totalorder %s28, 0
      %p177 = por %p175, %p176
      %p178 = scmp.ne.s32.totalorder %s170, %s172
      %p179 = scmp.eq.s32.totalorder %s33, 1
      %p180 = por %p178, %p179
      %p181 = scmp.ne.s32.totalorder %s172, %s173
      %p182 = scmp.eq.s32.totalorder %s33, 0
      %p183 = por %p181, %p182
      %p184 = scmp.ne.s32.totalorder %s172, %s173
      %p185 = scmp.eq.s32.totalorder %s34, 1
      %p186 = por %p184, %p185
      %p188 = scmp.ne.s32.totalorder %s173, %s187
      %p189 = scmp.eq.s32.totalorder %s34, 0
      %p190 = por %p188, %p189
      %s192 = sadd.s32 %s191, 1
      %p195 = scmp.eq.s32.totalorder %s28, 1
      %p196 = scmp.ne.s32.totalorder %s191, %s193
      %p197 = scmp.eq.s32.totalorder %s28, 0
      %p198 = por %p196, %p197
      %p199 = scmp.ne.s32.totalorder %s191, %s193
      %p200 = scmp.eq.s32.totalorder %s33, 1
      %p201 = por %p199, %p200
      %p202 = scmp.ne.s32.totalorder %s193, %s194
      %p203 = scmp.eq.s32.totalorder %s33, 0
      %p204 = por %p202, %p203
      %p205 = scmp.ne.s32.totalorder %s193, %s194
      %p206 = scmp.eq.s32.totalorder %s34, 1
      %p207 = por %p205, %p206
      %p209 = scmp.ne.s32.totalorder %s194, %s208
      %p210 = scmp.eq.s32.totalorder %s34, 0
      %p211 = por %p209, %p210
      %s213 = sadd.s32 %s212, 1
      %p216 = scmp.eq.s32.totalorder %s28, 1
      %p217 = scmp.ne.s32.totalorder %s212, %s214
      %p218 = scmp.eq.s32.totalorder %s28, 0
      %p219 = por %p217, %p218
      %p220 = scmp.ne.s32.totalorder %s212, %s214
      %p221 = scmp.eq.s32.totalorder %s33, 1
      %p222 = por %p220, %p221
      %p223 = scmp.ne.s32.totalorder %s214, %s215
      %p224 = scmp.eq.s32.totalorder %s33, 0
      %p225 = por %p223, %p224
      %p226 = scmp.ne.s32.totalorder %s214, %s215
      %p227 = scmp.eq.s32.totalorder %s34, 1
      %p228 = por %p226, %p227
      %p230 = scmp.ne.s32.totalorder %s215, %s229
      %p231 = scmp.eq.s32.totalorder %s34, 0
      %p232 = por %p230, %p231
      %s234 = sadd.s32 %s233, 1
      %p237 = scmp.eq.s32.totalorder %s28, 1
      %p238 = scmp.ne.s32.totalorder %s233, %s235
      %p239 = scmp.eq.s32.totalorder %s28, 0
      %p240 = por %p238, %p239
      %p241 = scmp.ne.s32.totalorder %s233, %s235
      %p242 = scmp.eq.s32.totalorder %s33, 1
      %p243 = por %p241, %p242
      %p244 = scmp.ne.s32.totalorder %s235, %s236
      %p245 = scmp.eq.s32.totalorder %s33, 0
      %p246 = por %p244, %p245
      %p247 = scmp.ne.s32.totalorder %s235, %s236
      %p248 = scmp.eq.s32.totalorder %s34, 1
      %p249 = por %p247, %p248
      %p251 = scmp.ne.s32.totalorder %s236, %s250
      %p252 = scmp.eq.s32.totalorder %s34, 0
      %p253 = por %p251, %p252
      %s255 = sadd.s32 %s254, 1
      %p258 = scmp.eq.s32.totalorder %s28, 1
      %p259 = scmp.ne.s32.totalorder %s254, %s256
      %p260 = scmp.eq.s32.totalorder %s28, 0
      %p261 = por %p259, %p260
      %p262 = scmp.ne.s32.totalorder %s254, %s256
      %p263 = scmp.eq.s32.totalorder %s33, 1
      %p264 = por %p262, %p263
      %p265 = scmp.ne.s32.totalorder %s256, %s257
      %p266 = scmp.eq.s32.totalorder %s33, 0
      %p267 = por %p265, %p266
      %p268 = scmp.ne.s32.totalorder %s256, %s257
      %p269 = scmp.eq.s32.totalorder %s34, 1
      %p270 = por %p268, %p269
      %p272 = scmp.ne.s32.totalorder %s257, %s271
      %p273 = scmp.eq.s32.totalorder %s34, 0
      %p274 = por %p272, %p273
      %s276 = sadd.s32 %s275, 1
      %p279 = scmp.eq.s32.totalorder %s28, 1
      %p280 = scmp.ne.s32.totalorder %s275, %s277
      %p281 = scmp.eq.s32.totalorder %s28, 0
      %p282 = por %p280, %p281
      %p283 = scmp.ne.s32.totalorder %s275, %s277
      %p284 = scmp.eq.s32.totalorder %s33, 1
      %p285 = por %p283, %p284
      %p286 = scmp.ne.s32.totalorder %s277, %s278
      %p287 = scmp.eq.s32.totalorder %s33, 0
      %p288 = por %p286, %p287
      %p289 = scmp.ne.s32.totalorder %s277, %s278
      %p290 = scmp.eq.s32.totalorder %s34, 1
      %p291 = por %p289, %p290
      %p293 = scmp.ne.s32.totalorder %s278, %s292
      %p294 = scmp.eq.s32.totalorder %s34, 0
      %p295 = por %p293, %p294
      %s297 = sadd.s32 %s296, 1
      %p300 = scmp.eq.s32.totalorder %s28, 1
      %p301 = scmp.ne.s32.totalorder %s296, %s298
      %p302 = scmp.eq.s32.totalorder %s28, 0
      %p303 = por %p301, %p302
      %p304 = scmp.ne.s32.totalorder %s296, %s298
      %p305 = scmp.eq.s32.totalorder %s33, 1
      %p306 = por %p304, %p305
      %p307 = scmp.ne.s32.totalorder %s298, %s299
      %p308 = scmp.eq.s32.totalorder %s33, 0
      %p309 = por %p307, %p308
      %p310 = scmp.ne.s32.totalorder %s298, %s299
      %p311 = scmp.eq.s32.totalorder %s34, 1
      %p312 = por %p310, %p311
      %p314 = scmp.ne.s32.totalorder %s299, %s313
      %p315 = scmp.eq.s32.totalorder %s34, 0
      %p316 = por %p314, %p315
      %s318 = sadd.s32 %s317, 1
      %p321 = scmp.eq.s32.totalorder %s28, 1
      %p322 = scmp.ne.s32.totalorder %s317, %s319
      %p323 = scmp.eq.s32.totalorder %s28, 0
      %p324 = por %p322, %p323
      %p325 = scmp.ne.s32.totalorder %s317, %s319
      %p326 = scmp.eq.s32.totalorder %s33, 1
      %p327 = por %p325, %p326
      %p328 = scmp.ne.s32.totalorder %s319, %s320
      %p329 = scmp.eq.s32.totalorder %s33, 0
      %p330 = por %p328, %p329
      %p331 = scmp.ne.s32.totalorder %s319, %s320
      %p332 = scmp.eq.s32.totalorder %s34, 1
      %p333 = por %p331, %p332
      %p335 = scmp.ne.s32.totalorder %s320, %s334
      %p336 = scmp.eq.s32.totalorder %s34, 0
      %p337 = por %p335, %p336
      %s339 = sadd.s32 %s338, 1
      %p342 = scmp.eq.s32.totalorder %s28, 1
      %p343 = scmp.ne.s32.totalorder %s338, %s340
      %p344 = scmp.eq.s32.totalorder %s28, 0
      %p345 = por %p343, %p344
      %p346 = scmp.ne.s32.totalorder %s338, %s340
      %p347 = scmp.eq.s32.totalorder %s33, 1
      %p348 = por %p346, %p347
      %p349 = scmp.ne.s32.totalorder %s340, %s341
      %p350 = scmp.eq.s32.totalorder %s33, 0
      %p351 = por %p349, %p350
      %p352 = scmp.ne.s32.totalorder %s340, %s341
      %p353 = scmp.eq.s32.totalorder %s34, 1
      %p354 = por %p352, %p353
      %p356 = scmp.ne.s32.totalorder %s341, %s355
      %p357 = scmp.eq.s32.totalorder %s34, 0
      %p358 = por %p356, %p357
      %s360 = sadd.s32 %s359, 1
      %p363 = scmp.eq.s32.totalorder %s28, 1
      %p364 = scmp.ne.s32.totalorder %s359, %s361
      %p365 = scmp.eq.s32.totalorder %s28, 0
      %p366 = por %p364, %p365
      %p367 = scmp.ne.s32.totalorder %s359, %s361
      %p368 = scmp.eq.s32.totalorder %s33, 1
      %p369 = por %p367, %p368
      %p370 = scmp.ne.s32.totalorder %s361, %s362
      %p371 = scmp.eq.s32.totalorder %s33, 0
      %p372 = por %p370, %p371
      %p373 = scmp.ne.s32.totalorder %s361, %s362
      %p374 = scmp.eq.s32.totalorder %s34, 1
      %p375 = por %p373, %p374
      %p377 = scmp.ne.s32.totalorder %s362, %s376
      %p378 = scmp.eq.s32.totalorder %s34, 0
      %p379 = por %p377, %p378
      %s381 = sadd.s32 %s380, 1
      %p384 = scmp.eq.s32.totalorder %s28, 1
      %p385 = scmp.ne.s32.totalorder %s380, %s382
      %p386 = scmp.eq.s32.totalorder %s28, 0
      %p387 = por %p385, %p386
      %p388 = scmp.ne.s32.totalorder %s380, %s382
      %p389 = scmp.eq.s32.totalorder %s33, 1
      %p390 = por %p388, %p389
      %p391 = scmp.ne.s32.totalorder %s382, %s383
      %p392 = scmp.eq.s32.totalorder %s33, 0
      %p393 = por %p391, %p392
      %p394 = scmp.ne.s32.totalorder %s382, %s383
      %p395 = scmp.eq.s32.totalorder %s34, 1
      %p396 = por %p394, %p395
      %p398 = scmp.ne.s32.totalorder %s383, %s397
      %p399 = scmp.eq.s32.totalorder %s34, 0
      %p400 = por %p398, %p399
      %s402 = sadd.s32 %s401, 1
      %p405 = scmp.eq.s32.totalorder %s28, 1
      %p406 = scmp.ne.s32.totalorder %s401, %s403
      %p407 = scmp.eq.s32.totalorder %s28, 0
      %p408 = por %p406, %p407
      %p409 = scmp.ne.s32.totalorder %s401, %s403
      %p410 = scmp.eq.s32.totalorder %s33, 1
      %p411 = por %p409, %p410
      %p412 = scmp.ne.s32.totalorder %s403, %s404
      %p413 = scmp.eq.s32.totalorder %s33, 0
      %p414 = por %p412, %p413
      %p415 = scmp.ne.s32.totalorder %s403, %s404
      %p416 = scmp.eq.s32.totalorder %s34, 1
      %p417 = por %p415, %p416
      %p419 = scmp.ne.s32.totalorder %s404, %s418
      %p420 = scmp.eq.s32.totalorder %s34, 0
      %p421 = por %p419, %p420
      %s423 = sadd.s32 %s422, 1
      %p426 = scmp.eq.s32.totalorder %s28, 1
      %p427 = scmp.ne.s32.totalorder %s422, %s424
      %p428 = scmp.eq.s32.totalorder %s28, 0
      %p429 = por %p427, %p428
      %p430 = scmp.ne.s32.totalorder %s422, %s424
      %p431 = scmp.eq.s32.totalorder %s33, 1
      %p432 = por %p430, %p431
      %p433 = scmp.ne.s32.totalorder %s424, %s425
      %p434 = scmp.eq.s32.totalorder %s33, 0
      %p435 = por %p433, %p434
      %p436 = scmp.ne.s32.totalorder %s424, %s425
      %p437 = scmp.eq.s32.totalorder %s34, 1
      %p438 = por %p436, %p437
      %p440 = scmp.ne.s32.totalorder %s425, %s439
      %p441 = scmp.eq.s32.totalorder %s34, 0
      %p442 = por %p440, %p441
      %s444 = sadd.s32 %s443, 1
      %p447 = scmp.eq.s32.totalorder %s28, 1
      %p448 = scmp.ne.s32.totalorder %s443, %s445
      %p449 = scmp.eq.s32.totalorder %s28, 0
      %p450 = por %p448, %p449
      %p451 = scmp.ne.s32.totalorder %s443, %s445
      %p452 = scmp.eq.s32.totalorder %s33, 1
      %p453 = por %p451, %p452
      %p454 = scmp.ne.s32.totalorder %s445, %s446
      %p455 = scmp.eq.s32.totalorder %s33, 0
      %p456 = por %p454, %p455
      %p457 = scmp.ne.s32.totalorder %s445, %s446
      %p458 = scmp.eq.s32.totalorder %s34, 1
      %p459 = por %p457, %p458
      %p461 = scmp.ne.s32.totalorder %s446, %s460
      %p462 = scmp.eq.s32.totalorder %s34, 0
      %p463 = por %p461, %p462
      %s464 = ssub.s32 %s35, %s47
      %s465 = ssub.s32 %s36, %s43
      %s466 = sor.u32 %s464, %s465
      %p467 = scmp.eq.s32.totalorder %s466, 0
      %s469 = sadd.s32 %s468, 1
      %s470 = scalar_select %p467, %s468, %s469
      %p473 = pneg %p467
      %p474 = scmp.eq.s32.totalorder %s28, 1
      %p475 = por %p473, %p474
      %p476 = scmp.ne.s32.totalorder %s468, %s471
      %p477 = scmp.eq.s32.totalorder %s28, 0
      %p478 = por %p476, %p477
      %p479 = scmp.ne.s32.totalorder %s468, %s471
      %p480 = scmp.eq.s32.totalorder %s33, 1
      %p481 = por %p479, %p480
      %p482 = scmp.ne.s32.totalorder %s471, %s472
      %p483 = scmp.eq.s32.totalorder %s33, 0
      %p484 = por %p482, %p483
      %p485 = scmp.ne.s32.totalorder %s471, %s472
      %p486 = scmp.eq.s32.totalorder %s34, 1
      %p487 = por %p485, %p486
      %p489 = scmp.ne.s32.totalorder %s472, %s488
      %p490 = scmp.eq.s32.totalorder %s34, 0
      %p491 = por %p489, %p490
      %p492 = scmp.le.s32.totalorder 1, %s28
      %p493 = scmp.lt.s32.totalorder %s28, 3
      %p494 = pnand %p492, %p493
      %p495 = pneg %p494
      // Predicated region
      $region9: #{tpu_custom_call.1} parent=5 // pred_check
        _
      $region10: #{tpu_custom_call.1} parent=5 // pred_check_branch
        %497 = sbr.rel (%p494) target = $region12
      $region11: #{tpu_custom_call.1} parent=5 // pred_region
        %s498 = ssub.s32 %s28, 1
        // Predicated region
        $region13: #{tpu_custom_call.1} parent=11 // pred_check
          %p499 = pneg %p141
        $region14: #{tpu_custom_call.1} parent=11 // pred_check_branch
          %501 = sbr.rel (%p499) target = $region16
        $region15: #{tpu_custom_call.1} parent=11 // pred_region
          _
        $region16: #{tpu_custom_call.1} parent=11 // pred_fallthru
          _
        // Predicated region
        $region17: #{tpu_custom_call.1} parent=11 // pred_check
          %p502 = pneg %p162
        $region18: #{tpu_custom_call.1} parent=11 // pred_check_branch
          %504 = sbr.rel (%p502) target = $region20
        $region19: #{tpu_custom_call.1} parent=11 // pred_region
          _
        $region20: #{tpu_custom_call.1} parent=11 // pred_fallthru
          _
        // Predicated region
        $region21: #{tpu_custom_call.1} parent=11 // pred_check
          %p505 = pneg %p183
        $region22: #{tpu_custom_call.1} parent=11 // pred_check_branch
          %507 = sbr.rel (%p505) target = $region24
        $region23: #{tpu_custom_call.1} parent=11 // pred_region
          _
        $region24: #{tpu_custom_call.1} parent=11 // pred_fallthru
          _
        // Predicated region
        $region25: #{tpu_custom_call.1} parent=11 // pred_check
          %p508 = pneg %p204
        $region26: #{tpu_custom_call.1} parent=11 // pred_check_branch
          %510 = sbr.rel (%p508) target = $region28
        $region27: #{tpu_custom_call.1} parent=11 // pred_region
          _
        $region28: #{tpu_custom_call.1} parent=11 // pred_fallthru
          _
        // Predicated region
        $region29: #{tpu_custom_call.1} parent=11 // pred_check
          %p511 = pneg %p225
        $region30: #{tpu_custom_call.1} parent=11 // pred_check_branch
          %513 = sbr.rel (%p511) target = $region32
        $region31: #{tpu_custom_call.1} parent=11 // pred_region
          _
        $region32: #{tpu_custom_call.1} parent=11 // pred_fallthru
          _
        // Predicated region
        $region33: #{tpu_custom_call.1} parent=11 // pred_check
          %p514 = pneg %p246
        $region34: #{tpu_custom_call.1} parent=11 // pred_check_branch
          %516 = sbr.rel (%p514) target = $region36
        $region35: #{tpu_custom_call.1} parent=11 // pred_region
          _
        $region36: #{tpu_custom_call.1} parent=11 // pred_fallthru
          _
        // Predicated region
        $region37: #{tpu_custom_call.1} parent=11 // pred_check
          %p517 = pneg %p267
        $region38: #{tpu_custom_call.1} parent=11 // pred_check_branch
          %519 = sbr.rel (%p517) target = $region40
        $region39: #{tpu_custom_call.1} parent=11 // pred_region
          _
        $region40: #{tpu_custom_call.1} parent=11 // pred_fallthru
          _
        // Predicated region
        $region41: #{tpu_custom_call.1} parent=11 // pred_check
          %p520 = pneg %p288
        $region42: #{tpu_custom_call.1} parent=11 // pred_check_branch
          %522 = sbr.rel (%p520) target = $region44
        $region43: #{tpu_custom_call.1} parent=11 // pred_region
          _
        $region44: #{tpu_custom_call.1} parent=11 // pred_fallthru
          _
        // Predicated region
        $region45: #{tpu_custom_call.1} parent=11 // pred_check
          %p523 = pneg %p309
        $region46: #{tpu_custom_call.1} parent=11 // pred_check_branch
          %525 = sbr.rel (%p523) target = $region48
        $region47: #{tpu_custom_call.1} parent=11 // pred_region
          _
        $region48: #{tpu_custom_call.1} parent=11 // pred_fallthru
          _
        // Predicated region
        $region49: #{tpu_custom_call.1} parent=11 // pred_check
          %p526 = pneg %p330
        $region50: #{tpu_custom_call.1} parent=11 // pred_check_branch
          %528 = sbr.rel (%p526) target = $region52
        $region51: #{tpu_custom_call.1} parent=11 // pred_region
          _
        $region52: #{tpu_custom_call.1} parent=11 // pred_fallthru
          _
        // Predicated region
        $region53: #{tpu_custom_call.1} parent=11 // pred_check
          %p529 = pneg %p351
        $region54: #{tpu_custom_call.1} parent=11 // pred_check_branch
          %531 = sbr.rel (%p529) target = $region56
        $region55: #{tpu_custom_call.1} parent=11 // pred_region
          _
        $region56: #{tpu_custom_call.1} parent=11 // pred_fallthru
          _
        // Predicated region
        $region57: #{tpu_custom_call.1} parent=11 // pred_check
          %p532 = pneg %p372
        $region58: #{tpu_custom_call.1} parent=11 // pred_check_branch
          %534 = sbr.rel (%p532) target = $region60
        $region59: #{tpu_custom_call.1} parent=11 // pred_region
          _
        $region60: #{tpu_custom_call.1} parent=11 // pred_fallthru
          _
        // Predicated region
        $region61: #{tpu_custom_call.1} parent=11 // pred_check
          %p535 = pneg %p393
        $region62: #{tpu_custom_call.1} parent=11 // pred_check_branch
          %537 = sbr.rel (%p535) target = $region64
        $region63: #{tpu_custom_call.1} parent=11 // pred_region
          _
        $region64: #{tpu_custom_call.1} parent=11 // pred_fallthru
          _
        // Predicated region
        $region65: #{tpu_custom_call.1} parent=11 // pred_check
          %p538 = pneg %p414
        $region66: #{tpu_custom_call.1} parent=11 // pred_check_branch
          %540 = sbr.rel (%p538) target = $region68
        $region67: #{tpu_custom_call.1} parent=11 // pred_region
          _
        $region68: #{tpu_custom_call.1} parent=11 // pred_fallthru
          _
        // Predicated region
        $region69: #{tpu_custom_call.1} parent=11 // pred_check
          %p541 = pneg %p435
        $region70: #{tpu_custom_call.1} parent=11 // pred_check_branch
          %543 = sbr.rel (%p541) target = $region72
        $region71: #{tpu_custom_call.1} parent=11 // pred_region
          _
        $region72: #{tpu_custom_call.1} parent=11 // pred_fallthru
          _
        // Predicated region
        $region73: #{tpu_custom_call.1} parent=11 // pred_check
          %p544 = pneg %p456
        $region74: #{tpu_custom_call.1} parent=11 // pred_check_branch
          %546 = sbr.rel (%p544) target = $region76
        $region75: #{tpu_custom_call.1} parent=11 // pred_region
          _
        $region76: #{tpu_custom_call.1} parent=11 // pred_fallthru
          _
      $region12: #{tpu_custom_call.1} parent=5 // pred_fallthru
        _
      %p547 = scmp.lt.s32.totalorder %s28, 2
      // Predicated region
      $region77: #{tpu_custom_call.1} parent=5 // pred_check
        %p548 = pneg %p547
      $region78: #{tpu_custom_call.1} parent=5 // pred_check_branch
        %550 = sbr.rel (%p548) target = $region80
      $region79: #{tpu_custom_call.1} parent=5 // pred_region
        // Predicated region
        $region81: #{tpu_custom_call.1} parent=79 // pred_check
          %p551 = pneg %p62
        $region82: #{tpu_custom_call.1} parent=79 // pred_check_branch
          %553 = sbr.rel (%p551) target = $region84
        $region83: #{tpu_custom_call.1} parent=79 // pred_region
          %p554 = scmp.lt.s32.totalorder %s35, 1
          %s555 = scalar_select %p554, %s35, 1
          %p556 = scmp.lt.s32.totalorder %s36, 0
          %s557 = scalar_select %p556, %s36, 0
          %s558 = sadd.s32 %s557, %s555
          %s559 = smul.addr %s558, 8
          %s560 = scalar_lea.vmem %s0, %s559
        $region84: #{tpu_custom_call.1} parent=79 // pred_fallthru
          _
        // Predicated region
        $region85: #{tpu_custom_call.1} parent=79 // pred_check
          %p561 = pneg %p88
        $region86: #{tpu_custom_call.1} parent=79 // pred_check_branch
          %563 = sbr.rel (%p561) target = $region88
        $region87: #{tpu_custom_call.1} parent=79 // pred_region
          %p564 = scmp.lt.s32.totalorder %s35, 1
          %s565 = scalar_select %p564, %s35, 1
          %s566 = smul.addr %s565, 4
          %s567 = scalar_lea.vmem %s1, %s566
        $region88: #{tpu_custom_call.1} parent=79 // pred_fallthru
          _
        // Predicated region
        $region89: #{tpu_custom_call.1} parent=79 // pred_check
          %p568 = pneg %p114
        $region90: #{tpu_custom_call.1} parent=79 // pred_check_branch
          %570 = sbr.rel (%p568) target = $region92
        $region91: #{tpu_custom_call.1} parent=79 // pred_region
          %p571 = scmp.lt.s32.totalorder %s35, 1
          %s572 = scalar_select %p571, %s35, 1
          %s573 = scalar_lea.vmem %s2, %s572
        $region92: #{tpu_custom_call.1} parent=79 // pred_fallthru
          _
      $region80: #{tpu_custom_call.1} parent=5 // pred_fallthru
        _
      %p574 = scmp.le.s32.totalorder 1, %s28
      %p575 = scmp.lt.s32.totalorder %s28, 3
      %p576 = pnand %p574, %p575
      %p577 = pneg %p576
      // Predicated region
      $region93: #{tpu_custom_call.1} parent=5 // pred_check
        _
      $region94: #{tpu_custom_call.1} parent=5 // pred_check_branch
        %579 = sbr.rel (%p576) target = $region96
      $region95: #{tpu_custom_call.1} parent=5 // pred_region
        %s580 = ssub.s32 %s28, 1
        %p581 = scmp.lt.s32.totalorder %s37, 1
        %s582 = scalar_select %p581, %s37, 1
        %p583 = scmp.lt.s32.totalorder %s38, 0
        %s584 = scalar_select %p583, %s38, 0
        %s585 = sadd.s32 %s584, %s582
        %s586 = smul.addr %s585, 8
        %s587 = scalar_lea.vmem %s0, %s586
        %p588 = pneg %p68
        %p589 = pneg %p65
        %p590 = scmp.lt.s32.totalorder %s37, 1
        %s591 = scalar_select %p590, %s37, 1
        %s592 = smul.addr %s591, 4
        %s593 = scalar_lea.vmem %s1, %s592
        %p594 = pneg %p94
        %p595 = pneg %p91
        %p596 = scmp.lt.s32.totalorder %s37, 1
        %s597 = scalar_select %p596, %s37, 1
        %s598 = scalar_lea.vmem %s2, %s597
        %p599 = pneg %p120
        %p600 = pneg %p117
        %p601 = pneg %p141
        %p602 = pneg %p138
        %p603 = pneg %p162
        %p604 = pneg %p159
        %p605 = pneg %p183
        %p606 = pneg %p180
        %p607 = pneg %p204
        %p608 = pneg %p201
        %p609 = pneg %p225
        %p610 = pneg %p222
        %p611 = pneg %p246
        %p612 = pneg %p243
        %p613 = pneg %p267
        %p614 = pneg %p264
        %p615 = pneg %p288
        %p616 = pneg %p285
        %p617 = pneg %p309
        %p618 = pneg %p306
        %p619 = pneg %p330
        %p620 = pneg %p327
        %p621 = pneg %p351
        %p622 = pneg %p348
        %p623 = pneg %p372
        %p624 = pneg %p369
        %p625 = pneg %p393
        %p626 = pneg %p390
        %p627 = pneg %p414
        %p628 = pneg %p411
        %p629 = pneg %p435
        %p630 = pneg %p432
        %p631 = pneg %p456
        %p632 = pneg %p453
        %p633 = pneg %p484
        %p634 = pneg %p481
        %s635 = sand.u32 %s471, 1
        %s636 = scalar_lea.sflag [#allocation5], %s635
        %s637 = sand.u32 %s471, 1
        %s638 = smul.addr %s637, 8
        %s639 = scalar_lea.vmem [#allocation4], %s638
        %p640 = scmp.lt.s32.totalorder %s37, 1
        %s641 = scalar_select %p640, %s37, 1
        %p642 = scmp.lt.s32.totalorder %s38, 0
        %s643 = scalar_select %p642, %s38, 0
        %s644 = sadd.s32 %s643, %s641
        %s645 = smul.addr %s644, 8
        %s646 = scalar_lea.vmem %s0, %s645
        %p647 = scmp.lt.s32.totalorder %s37, 1
        %s648 = scalar_select %p647, %s37, 1
        %s649 = smul.addr %s648, 4
        %s650 = scalar_lea.vmem %s1, %s649
        %p651 = scmp.lt.s32.totalorder %s37, 1
        %s652 = scalar_select %p651, %s37, 1
        %s653 = scalar_lea.vmem %s2, %s652
        %p655 = scmp.eq.s32.totalorder %s38, 0
        // Predicated region
        $region97: #{tpu_custom_call.1} parent=95 // pred_check
          %p656 = pneg %p655
        $region98: #{tpu_custom_call.1} parent=95 // pred_check_branch
          %658 = sbr.rel (%p656) target = $region100
        $region99: #{tpu_custom_call.1} parent=95 // pred_region
          %v659 = vld [vmem:[%s650] sm:$0xf]
          %v660 = vld [vmem:[%s5] sm:$0xf]
          %v661 = vld [vmem:[%s5 + $0x4] sm:$0xf]
          %v662 = vld [vmem:[%s5 + $0x8] sm:$0xf]
          %v663 = vld [vmem:[%s5 + $0xc] sm:$0xf]
          %v664 = vld [vmem:[%s5 + $0x10] sm:$0xf]
          %v665 = vld [vmem:[%s5 + $0x14] sm:$0xf]
          %v666 = vld [vmem:[%s5 + $0x18] sm:$0xf]
          %v667 = vld [vmem:[%s5 + $0x1c] sm:$0xf]
          %v668 = vld [vmem:[%s5 + $0x20] sm:$0xf]
          %v669 = vld [vmem:[%s5 + $0x24] sm:$0xf]
          %v670 = vld [vmem:[%s5 + $0x28] sm:$0xf]
          %v671 = vld [vmem:[%s5 + $0x2c] sm:$0xf]
          %v672 = vld [vmem:[%s5 + $0x30] sm:$0xf]
          %v673 = vld [vmem:[%s5 + $0x34] sm:$0xf]
          %v674 = vld [vmem:[%s5 + $0x38] sm:$0xf]
          %v675 = vld [vmem:[%s5 + $0x3c] sm:$0xf]
          %v676 = vld [vmem:[%s6] sm:$0xff]
          %v677 = vld [vmem:[%s6 + $0x8] sm:$0xff]
          %v678 = vld [vmem:[%s6 + $0x10] sm:$0xff]
          %v679 = vld [vmem:[%s6 + $0x18] sm:$0xff]
          %681 = vset.pattern.permute.xlu0 0
          %682 = vperm.xlu0 %681, %v676
          %v683 = vpop.permute.xlu0 %682
          %686 = vset.pattern.permute.xlu0 0
          %687 = vperm.xlu0 %686, %v677
          %v688 = vpop.permute.xlu0 %687
          %691 = vset.pattern.permute.xlu0 0
          %692 = vperm.xlu0 %691, %v678
          %v693 = vpop.permute.xlu0 %692
          %696 = vset.pattern.permute.xlu0 0
          %697 = vperm.xlu0 %696, %v679
          %v698 = vpop.permute.xlu0 %697
          %v716 = vunpack.c.l.b16 %v660
          %v717 = vunpack.c.l.b16 %v661
          %v718 = vunpack.c.l.b16 %v662
          %v719 = vunpack.c.l.b16 %v663
          %v720 = vunpack.c.l.b16 %v664
          %v721 = vunpack.c.l.b16 %v665
          %v722 = vunpack.c.l.b16 %v666
          %v723 = vunpack.c.l.b16 %v667
          %v724 = vunpack.c.l.b16 %v668
          %v725 = vunpack.c.l.b16 %v669
          %v726 = vunpack.c.l.b16 %v670
          %v727 = vunpack.c.l.b16 %v671
          %v728 = vunpack.c.l.b16 %v672
          %v729 = vunpack.c.l.b16 %v673
          %v730 = vunpack.c.l.b16 %v674
          %v731 = vunpack.c.l.b16 %v675
          %v732 = vpack.c.b16 %v717, %v716
          %v733 = vpack.c.b16 %v719, %v718
          %v734 = vpack.c.b16 %v721, %v720
          %v735 = vpack.c.b16 %v723, %v722
          %v736 = vpack.c.b16 %v725, %v724
          %v737 = vpack.c.b16 %v727, %v726
          %v738 = vpack.c.b16 %v729, %v728
          %v739 = vpack.c.b16 %v731, %v730
          %748 = vxpose.xlu0.c.b16.start [1/8] %v732, 128
          %749 = vxpose.xlu0.c.b16.cont [2/8] %v733, 128
          %750 = vxpose.xlu0.c.b16.cont [3/8] 0, 128
          %751 = vxpose.xlu0.c.b16.cont [4/8] 0, 128
          %752 = vxpose.xlu0.c.b16.cont [5/8] 0, 128
          %753 = vxpose.xlu0.c.b16.cont [6/8] 0, 128
          %754 = vxpose.xlu0.c.b16.cont [7/8] 0, 128
          %755 = vxpose.xlu0.c.b16.end [8/8] 0, 128
          %v756 = vpop.trf.xlu0
          %v757 = vpop.trf.xlu0
          %v758 = vpop.trf.xlu0
          %v759 = vpop.trf.xlu0
          %v760 = vpop.trf.xlu0
          %v761 = vpop.trf.xlu0
          %v762 = vpop.trf.xlu0
          %v763 = vpop.trf.xlu0
          %764 = vxpose.xlu0.c.b16.start [1/8] %v734, 128
          %765 = vxpose.xlu0.c.b16.cont [2/8] %v735, 128
          %766 = vxpose.xlu0.c.b16.cont [3/8] 0, 128
          %767 = vxpose.xlu0.c.b16.cont [4/8] 0, 128
          %768 = vxpose.xlu0.c.b16.cont [5/8] 0, 128
          %769 = vxpose.xlu0.c.b16.cont [6/8] 0, 128
          %770 = vxpose.xlu0.c.b16.cont [7/8] 0, 128
          %771 = vxpose.xlu0.c.b16.end [8/8] 0, 128
          %v772 = vpop.trf.xlu0
          %v773 = vpop.trf.xlu0
          %v774 = vpop.trf.xlu0
          %v775 = vpop.trf.xlu0
          %v776 = vpop.trf.xlu0
          %v777 = vpop.trf.xlu0
          %v778 = vpop.trf.xlu0
          %v779 = vpop.trf.xlu0
          %780 = vxpose.xlu0.c.b16.start [1/8] %v736, 128
          %781 = vxpose.xlu0.c.b16.cont [2/8] %v737, 128
          %782 = vxpose.xlu0.c.b16.cont [3/8] 0, 128
          %783 = vxpose.xlu0.c.b16.cont [4/8] 0, 128
          %784 = vxpose.xlu0.c.b16.cont [5/8] 0, 128
          %785 = vxpose.xlu0.c.b16.cont [6/8] 0, 128
          %786 = vxpose.xlu0.c.b16.cont [7/8] 0, 128
          %787 = vxpose.xlu0.c.b16.end [8/8] 0, 128
          %v788 = vpop.trf.xlu0
          %v789 = vpop.trf.xlu0
          %v790 = vpop.trf.xlu0
          %v791 = vpop.trf.xlu0
          %v792 = vpop.trf.xlu0
          %v793 = vpop.trf.xlu0
          %v794 = vpop.trf.xlu0
          %v795 = vpop.trf.xlu0
          %796 = vxpose.xlu0.c.b16.start [1/8] %v738, 128
          %797 = vxpose.xlu0.c.b16.cont [2/8] %v739, 128
          %798 = vxpose.xlu0.c.b16.cont [3/8] 0, 128
          %799 = vxpose.xlu0.c.b16.cont [4/8] 0, 128
          %800 = vxpose.xlu0.c.b16.cont [5/8] 0, 128
          %801 = vxpose.xlu0.c.b16.cont [6/8] 0, 128
          %802 = vxpose.xlu0.c.b16.cont [7/8] 0, 128
          %803 = vxpose.xlu0.c.b16.end [8/8] 0, 128
          %v804 = vpop.trf.xlu0
          %v805 = vpop.trf.xlu0
          %v806 = vpop.trf.xlu0
          %v807 = vpop.trf.xlu0
          %v808 = vpop.trf.xlu0
          %v809 = vpop.trf.xlu0
          %v810 = vpop.trf.xlu0
          %v811 = vpop.trf.xlu0
          %v816 = vunpack.c.l.b16 %v756
          %v817 = vunpack.c.l.b16 %v772
          %v818 = vunpack.c.l.b16 %v788
          %v819 = vunpack.c.l.b16 %v804
          %v820 = vpack.c.b16 %v817, %v816
          %v821 = vpack.c.b16 %v819, %v818
          %vm822 = vcmask 261120
          %v824 = vsel %vm822, %v820, 0
          %v827 = vsel %vm822, %v821, 0
          %v830 = vsel %vm822, %v659, 0
          %832 = vmatprep.subr.bf16.mxu0 0
          %833 = vmatpush1.bf16.xpose.msra.mxu0 0
          %834 = vmatprep.subr.bf16.mxu0 0
          %835 = vmatpush1.bf16.xpose.msra.mxu0 0
          %836 = vmatprep.subr.bf16.mxu0 0
          %837 = vmatpush1.bf16.xpose.msra.mxu0 0
          %838 = vmatprep.subr.bf16.mxu0 0
          %839 = vmatpush1.bf16.xpose.msra.mxu0 0
          %840 = vmatprep.subr.bf16.mxu0 0
          %841 = vmatpush1.bf16.xpose.msra.mxu0 0
          %842 = vmatprep.subr.bf16.mxu0 0
          %843 = vmatpush1.bf16.xpose.msra.mxu0 0
          %844 = vmatprep.subr.bf16.mxu0 0
          %845 = vmatpush1.bf16.xpose.msra.mxu0 0
          %846 = vmatprep.subr.bf16.mxu0 0
          %847 = vmatpush1.bf16.xpose.msra.mxu0 %v830
          %848 = vmatprep.subr.bf16.mxu0 0
          %849 = vmatpush2.bf16.xpose.msra.mxu0 0
          %850 = vmatprep.subr.bf16.mxu0 0
          %851 = vmatpush2.bf16.xpose.msra.mxu0 0
          %852 = vmatprep.subr.bf16.mxu0 0
          %853 = vmatpush2.bf16.xpose.msra.mxu0 0
          %854 = vmatprep.subr.bf16.mxu0 0
          %855 = vmatpush2.bf16.xpose.msra.mxu0 0
          %856 = vmatprep.subr.bf16.mxu0 0
          %857 = vmatpush2.bf16.xpose.msra.mxu0 0
          %858 = vmatprep.subr.bf16.mxu0 0
          %859 = vmatpush2.bf16.xpose.msra.mxu0 0
          %860 = vmatprep.subr.bf16.mxu0 0
          %861 = vmatpush2.bf16.xpose.msra.mxu0 0
          %862 = vmatprep.subr.bf16.mxu0 0
          %863 = vmatpush2.bf16.xpose.msra.mxu0 0
          %864 = vmatprep.mubr.bf16.mxu0 0
          %865 = vmatmul.mubr.bf16.gmra.mxu0 %v824
          %v866 = vpop.f32.mrf.mxu0
          %v867 = vadd.f32 %v683, %v866
          %v868 = vpop.f32.mrf.mxu0
          %v869 = vpop.f32.mrf.mxu0
          %v870 = vadd.f32 %v688, %v869
          %v871 = vpop.f32.mrf.mxu0
          %872 = vmatprep.mubr.bf16.mxu0 0
          %873 = vmatmul.mubr.bf16.gmra.mxu0 %v827
          %v874 = vpop.f32.mrf.mxu0
          %v875 = vadd.f32 %v693, %v874
          %v876 = vpop.f32.mrf.mxu0
          %v877 = vpop.f32.mrf.mxu0
          %v878 = vadd.f32 %v698, %v877
          %v879 = vpop.f32.mrf.mxu0
          %880 = vdwg.mxu0
          %v881 = vld [vmem:[%s7] sm:$0xf]
          %v882 = vld [vmem:[%s7 + $0x4] sm:$0xf]
          %v883 = vld [vmem:[%s7 + $0x8] sm:$0xf]
          %v884 = vld [vmem:[%s7 + $0xc] sm:$0xf]
          %v885 = vld [vmem:[%s7 + $0x10] sm:$0xf]
          %v886 = vld [vmem:[%s7 + $0x14] sm:$0xf]
          %v887 = vld [vmem:[%s7 + $0x18] sm:$0xf]
          %v888 = vld [vmem:[%s7 + $0x1c] sm:$0xf]
          %v889 = vld [vmem:[%s7 + $0x20] sm:$0xf]
          %v890 = vld [vmem:[%s7 + $0x24] sm:$0xf]
          %v891 = vld [vmem:[%s7 + $0x28] sm:$0xf]
          %v892 = vld [vmem:[%s7 + $0x2c] sm:$0xf]
          %v893 = vld [vmem:[%s7 + $0x30] sm:$0xf]
          %v894 = vld [vmem:[%s7 + $0x34] sm:$0xf]
          %v895 = vld [vmem:[%s7 + $0x38] sm:$0xf]
          %v896 = vld [vmem:[%s7 + $0x3c] sm:$0xf]
          %v897 = vld [vmem:[%s8] sm:$0xff]
          %v898 = vld [vmem:[%s8 + $0x8] sm:$0xff]
          %v899 = vld [vmem:[%s8 + $0x10] sm:$0xff]
          %v900 = vld [vmem:[%s8 + $0x18] sm:$0xff]
          %902 = vset.pattern.permute.xlu0 0
          %903 = vperm.xlu0 %902, %v897
          %v904 = vpop.permute.xlu0 %903
          %907 = vset.pattern.permute.xlu0 0
          %908 = vperm.xlu0 %907, %v898
          %v909 = vpop.permute.xlu0 %908
          %912 = vset.pattern.permute.xlu0 0
          %913 = vperm.xlu0 %912, %v899
          %v914 = vpop.permute.xlu0 %913
          %917 = vset.pattern.permute.xlu0 0
          %918 = vperm.xlu0 %917, %v900
          %v919 = vpop.permute.xlu0 %918
          %v937 = vunpack.c.l.b16 %v881
          %v938 = vunpack.c.l.b16 %v882
          %v939 = vunpack.c.l.b16 %v883
          %v940 = vunpack.c.l.b16 %v884
          %v941 = vunpack.c.l.b16 %v885
          %v942 = vunpack.c.l.b16 %v886
          %v943 = vunpack.c.l.b16 %v887
          %v944 = vunpack.c.l.b16 %v888
          %v945 = vunpack.c.l.b16 %v889
          %v946 = vunpack.c.l.b16 %v890
          %v947 = vunpack.c.l.b16 %v891
          %v948 = vunpack.c.l.b16 %v892
          %v949 = vunpack.c.l.b16 %v893
          %v950 = vunpack.c.l.b16 %v894
          %v951 = vunpack.c.l.b16 %v895
          %v952 = vunpack.c.l.b16 %v896
          %v953 = vpack.c.b16 %v938, %v937
          %v954 = vpack.c.b16 %v940, %v939
          %v955 = vpack.c.b16 %v942, %v941
          %v956 = vpack.c.b16 %v944, %v943
          %v957 = vpack.c.b16 %v946, %v945
          %v958 = vpack.c.b16 %v948, %v947
          %v959 = vpack.c.b16 %v950, %v949
          %v960 = vpack.c.b16 %v952, %v951
          %969 = vxpose.xlu0.c.b16.start [1/8] %v953, 128
          %970 = vxpose.xlu0.c.b16.cont [2/8] %v954, 128
          %971 = vxpose.xlu0.c.b16.cont [3/8] 0, 128
          %972 = vxpose.xlu0.c.b16.cont [4/8] 0, 128
          %973 = vxpose.xlu0.c.b16.cont [5/8] 0, 128
          %974 = vxpose.xlu0.c.b16.cont [6/8] 0, 128
          %975 = vxpose.xlu0.c.b16.cont [7/8] 0, 128
          %976 = vxpose.xlu0.c.b16.end [8/8] 0, 128
          %v977 = vpop.trf.xlu0
          %v978 = vpop.trf.xlu0
          %v979 = vpop.trf.xlu0
          %v980 = vpop.trf.xlu0
          %v981 = vpop.trf.xlu0
          %v982 = vpop.trf.xlu0
          %v983 = vpop.trf.xlu0
          %v984 = vpop.trf.xlu0
          %985 = vxpose.xlu0.c.b16.start [1/8] %v955, 128
          %986 = vxpose.xlu0.c.b16.cont [2/8] %v956, 128
          %987 = vxpose.xlu0.c.b16.cont [3/8] 0, 128
          %988 = vxpose.xlu0.c.b16.cont [4/8] 0, 128
          %989 = vxpose.xlu0.c.b16.cont [5/8] 0, 128
          %990 = vxpose.xlu0.c.b16.cont [6/8] 0, 128
          %991 = vxpose.xlu0.c.b16.cont [7/8] 0, 128
          %992 = vxpose.xlu0.c.b16.end [8/8] 0, 128
          %v993 = vpop.trf.xlu0
          %v994 = vpop.trf.xlu0
          %v995 = vpop.trf.xlu0
          %v996 = vpop.trf.xlu0
          %v997 = vpop.trf.xlu0
          %v998 = vpop.trf.xlu0
          %v999 = vpop.trf.xlu0
          %v1000 = vpop.trf.xlu0
          %1001 = vxpose.xlu0.c.b16.start [1/8] %v957, 128
          %1002 = vxpose.xlu0.c.b16.cont [2/8] %v958, 128
          %1003 = vxpose.xlu0.c.b16.cont [3/8] 0, 128
          %1004 = vxpose.xlu0.c.b16.cont [4/8] 0, 128
          %1005 = vxpose.xlu0.c.b16.cont [5/8] 0, 128
          %1006 = vxpose.xlu0.c.b16.cont [6/8] 0, 128
          %1007 = vxpose.xlu0.c.b16.cont [7/8] 0, 128
          %1008 = vxpose.xlu0.c.b16.end [8/8] 0, 128
          %v1009 = vpop.trf.xlu0
          %v1010 = vpop.trf.xlu0
          %v1011 = vpop.trf.xlu0
          %v1012 = vpop.trf.xlu0
          %v1013 = vpop.trf.xlu0
          %v1014 = vpop.trf.xlu0
          %v1015 = vpop.trf.xlu0
          %v1016 = vpop.trf.xlu0
          %1017 = vxpose.xlu0.c.b16.start [1/8] %v959, 128
          %1018 = vxpose.xlu0.c.b16.cont [2/8] %v960, 128
          %1019 = vxpose.xlu0.c.b16.cont [3/8] 0, 128
          %1020 = vxpose.xlu0.c.b16.cont [4/8] 0, 128
          %1021 = vxpose.xlu0.c.b16.cont [5/8] 0, 128
          %1022 = vxpose.xlu0.c.b16.cont [6/8] 0, 128
          %1023 = vxpose.xlu0.c.b16.cont [7/8] 0, 128
          %1024 = vxpose.xlu0.c.b16.end [8/8] 0, 128
          %v1025 = vpop.trf.xlu0
          %v1026 = vpop.trf.xlu0
          %v1027 = vpop.trf.xlu0
          %v1028 = vpop.trf.xlu0
          %v1029 = vpop.trf.xlu0
          %v1030 = vpop.trf.xlu0
          %v1031 = vpop.trf.xlu0
          %v1032 = vpop.trf.xlu0
          %v1037 = vunpack.c.l.b16 %v977
          %v1038 = vunpack.c.l.b16 %v993
          %v1039 = vunpack.c.l.b16 %v1009
          %v1040 = vunpack.c.l.b16 %v1025
          %v1041 = vpack.c.b16 %v1038, %v1037
          %v1042 = vpack.c.b16 %v1040, %v1039
          %v1044 = vsel %vm822, %v1041, 0
          %v1047 = vsel %vm822, %v1042, 0
          %1049 = vmatprep.subr.bf16.mxu0 0
          %1050 = vmatpush1.bf16.xpose.msra.mxu0 0
          %1051 = vmatprep.subr.bf16.mxu0 0
          %1052 = vmatpush1.bf16.xpose.msra.mxu0 0
          %1053 = vmatprep.subr.bf16.mxu0 0
          %1054 = vmatpush1.bf16.xpose.msra.mxu0 0
          %1055 = vmatprep.subr.bf16.mxu0 0
          %1056 = vmatpush1.bf16.xpose.msra.mxu0 0
          %1057 = vmatprep.subr.bf16.mxu0 0
          %1058 = vmatpush1.bf16.xpose.msra.mxu0 0
          %1059 = vmatprep.subr.bf16.mxu0 0
          %1060 = vmatpush1.bf16.xpose.msra.mxu0 0
          %1061 = vmatprep.subr.bf16.mxu0 0
          %1062 = vmatpush1.bf16.xpose.msra.mxu0 0
          %1063 = vmatprep.subr.bf16.mxu0 0
          %1064 = vmatpush1.bf16.xpose.msra.mxu0 %v830
          %1065 = vmatprep.subr.bf16.mxu0 0
          %1066 = vmatpush2.bf16.xpose.msra.mxu0 0
          %1067 = vmatprep.subr.bf16.mxu0 0
          %1068 = vmatpush2.bf16.xpose.msra.mxu0 0
          %1069 = vmatprep.subr.bf16.mxu0 0
          %1070 = vmatpush2.bf16.xpose.msra.mxu0 0
          %1071 = vmatprep.subr.bf16.mxu0 0
          %1072 = vmatpush2.bf16.xpose.msra.mxu0 0
          %1073 = vmatprep.subr.bf16.mxu0 0
          %1074 = vmatpush2.bf16.xpose.msra.mxu0 0
          %1075 = vmatprep.subr.bf16.mxu0 0
          %1076 = vmatpush2.bf16.xpose.msra.mxu0 0
          %1077 = vmatprep.subr.bf16.mxu0 0
          %1078 = vmatpush2.bf16.xpose.msra.mxu0 0
          %1079 = vmatprep.subr.bf16.mxu0 0
          %1080 = vmatpush2.bf16.xpose.msra.mxu0 0
          %1081 = vmatprep.mubr.bf16.mxu0 0
          %1082 = vmatmul.mubr.bf16.gmra.mxu0 %v1044
          %v1083 = vpop.f32.mrf.mxu0
          %v1084 = vadd.f32 %v904, %v1083
          %v1085 = vpop.f32.mrf.mxu0
          %v1086 = vpop.f32.mrf.mxu0
          %v1087 = vadd.f32 %v909, %v1086
          %v1088 = vpop.f32.mrf.mxu0
          %1089 = vmatprep.mubr.bf16.mxu0 0
          %1090 = vmatmul.mubr.bf16.gmra.mxu0 %v1047
          %v1091 = vpop.f32.mrf.mxu0
          %v1092 = vadd.f32 %v914, %v1091
          %v1093 = vpop.f32.mrf.mxu0
          %v1094 = vpop.f32.mrf.mxu0
          %v1095 = vadd.f32 %v919, %v1094
          %v1096 = vpop.f32.mrf.mxu0
          %1097 = vdwg.mxu0
          %v1098 = vpack.c.bf16 %v867, %v867
          %v1099 = vpack.c.bf16 %v870, %v870
          %v1100 = vpack.c.bf16 %v875, %v875
          %v1101 = vpack.c.bf16 %v878, %v878
          %vm1102 = vcmask 60416
          %1103 = vst.msk [vmem:[#allocation2] sm:$0xf] %vm1102, %v1098
          %1104 = vst.msk [vmem:[#allocation2 + $0x4] sm:$0xf] %vm1102, %v1099
          %1105 = vst.msk [vmem:[#allocation2 + $0x8] sm:$0xf] %vm1102, %v1100
          %1106 = vst.msk [vmem:[#allocation2 + $0xc] sm:$0xf] %vm1102, %v1101
          %1107 = vxpose.xlu0.b32.start [1/16] %v1084, 128
          %1108 = vxpose.xlu0.b32.cont [2/16] 0.0, 128
          %1109 = vxpose.xlu0.b32.cont [3/16] 0.0, 128
          %1110 = vxpose.xlu0.b32.cont [4/16] 0.0, 128
          %1111 = vxpose.xlu0.b32.cont [5/16] 0.0, 128
          %1112 = vxpose.xlu0.b32.cont [6/16] 0.0, 128
          %1113 = vxpose.xlu0.b32.cont [7/16] 0.0, 128
          %1114 = vxpose.xlu0.b32.cont [8/16] 0.0, 128
          %1115 = vxpose.xlu0.b32.cont [9/16] 0.0, 128
          %1116 = vxpose.xlu0.b32.cont [10/16] 0.0, 128
          %1117 = vxpose.xlu0.b32.cont [11/16] 0.0, 128
          %1118 = vxpose.xlu0.b32.cont [12/16] 0.0, 128
          %1119 = vxpose.xlu0.b32.cont [13/16] 0.0, 128
          %1120 = vxpose.xlu0.b32.cont [14/16] 0.0, 128
          %1121 = vxpose.xlu0.b32.cont [15/16] 0.0, 128
          %1122 = vxpose.xlu0.b32.end [16/16] 0.0, 128
          %v1123 = vpop.trf.xlu0
          %v1124 = vpop.trf.xlu0
          %v1125 = vpop.trf.xlu0
          %v1126 = vpop.trf.xlu0
          %v1127 = vpop.trf.xlu0
          %v1128 = vpop.trf.xlu0
          %v1129 = vpop.trf.xlu0
          %v1130 = vpop.trf.xlu0
          %v1131 = vpop.trf.xlu0
          %v1132 = vpop.trf.xlu0
          %v1133 = vpop.trf.xlu0
          %v1134 = vpop.trf.xlu0
          %v1135 = vpop.trf.xlu0
          %v1136 = vpop.trf.xlu0
          %v1137 = vpop.trf.xlu0
          %v1138 = vpop.trf.xlu0
          %1139 = vxpose.xlu0.b32.start [1/16] %v1087, 128
          %1140 = vxpose.xlu0.b32.cont [2/16] 0.0, 128
          %1141 = vxpose.xlu0.b32.cont [3/16] 0.0, 128
          %1142 = vxpose.xlu0.b32.cont [4/16] 0.0, 128
          %1143 = vxpose.xlu0.b32.cont [5/16] 0.0, 128
          %1144 = vxpose.xlu0.b32.cont [6/16] 0.0, 128
          %1145 = vxpose.xlu0.b32.cont [7/16] 0.0, 128
          %1146 = vxpose.xlu0.b32.cont [8/16] 0.0, 128
          %1147 = vxpose.xlu0.b32.cont [9/16] 0.0, 128
          %1148 = vxpose.xlu0.b32.cont [10/16] 0.0, 128
          %1149 = vxpose.xlu0.b32.cont [11/16] 0.0, 128
          %1150 = vxpose.xlu0.b32.cont [12/16] 0.0, 128
          %1151 = vxpose.xlu0.b32.cont [13/16] 0.0, 128
          %1152 = vxpose.xlu0.b32.cont [14/16] 0.0, 128
          %1153 = vxpose.xlu0.b32.cont [15/16] 0.0, 128
          %1154 = vxpose.xlu0.b32.end [16/16] 0.0, 128
          %v1155 = vpop.trf.xlu0
          %v1156 = vpop.trf.xlu0
          %v1157 = vpop.trf.xlu0
          %v1158 = vpop.trf.xlu0
          %v1159 = vpop.trf.xlu0
          %v1160 = vpop.trf.xlu0
          %v1161 = vpop.trf.xlu0
          %v1162 = vpop.trf.xlu0
          %v1163 = vpop.trf.xlu0
          %v1164 = vpop.trf.xlu0
          %v1165 = vpop.trf.xlu0
          %v1166 = vpop.trf.xlu0
          %v1167 = vpop.trf.xlu0
          %v1168 = vpop.trf.xlu0
          %v1169 = vpop.trf.xlu0
          %v1170 = vpop.trf.xlu0
          %1171 = vxpose.xlu0.b32.start [1/16] %v1092, 128
          %1172 = vxpose.xlu0.b32.cont [2/16] 0.0, 128
          %1173 = vxpose.xlu0.b32.cont [3/16] 0.0, 128
          %1174 = vxpose.xlu0.b32.cont [4/16] 0.0, 128
          %1175 = vxpose.xlu0.b32.cont [5/16] 0.0, 128
          %1176 = vxpose.xlu0.b32.cont [6/16] 0.0, 128
          %1177 = vxpose.xlu0.b32.cont [7/16] 0.0, 128
          %1178 = vxpose.xlu0.b32.cont [8/16] 0.0, 128
          %1179 = vxpose.xlu0.b32.cont [9/16] 0.0, 128
          %1180 = vxpose.xlu0.b32.cont [10/16] 0.0, 128
          %1181 = vxpose.xlu0.b32.cont [11/16] 0.0, 128
          %1182 = vxpose.xlu0.b32.cont [12/16] 0.0, 128
          %1183 = vxpose.xlu0.b32.cont [13/16] 0.0, 128
          %1184 = vxpose.xlu0.b32.cont [14/16] 0.0, 128
          %1185 = vxpose.xlu0.b32.cont [15/16] 0.0, 128
          %1186 = vxpose.xlu0.b32.end [16/16] 0.0, 128
          %v1187 = vpop.trf.xlu0
          %v1188 = vpop.trf.xlu0
          %v1189 = vpop.trf.xlu0
          %v1190 = vpop.trf.xlu0
          %v1191 = vpop.trf.xlu0
          %v1192 = vpop.trf.xlu0
          %v1193 = vpop.trf.xlu0
          %v1194 = vpop.trf.xlu0
          %v1195 = vpop.trf.xlu0
          %v1196 = vpop.trf.xlu0
          %v1197 = vpop.trf.xlu0
          %v1198 = vpop.trf.xlu0
          %v1199 = vpop.trf.xlu0
          %v1200 = vpop.trf.xlu0
          %v1201 = vpop.trf.xlu0
          %v1202 = vpop.trf.xlu0
          %1203 = vxpose.xlu0.b32.start [1/16] %v1095, 128
          %1204 = vxpose.xlu0.b32.cont [2/16] 0.0, 128
          %1205 = vxpose.xlu0.b32.cont [3/16] 0.0, 128
          %1206 = vxpose.xlu0.b32.cont [4/16] 0.0, 128
          %1207 = vxpose.xlu0.b32.cont [5/16] 0.0, 128
          %1208 = vxpose.xlu0.b32.cont [6/16] 0.0, 128
          %1209 = vxpose.xlu0.b32.cont [7/16] 0.0, 128
          %1210 = vxpose.xlu0.b32.cont [8/16] 0.0, 128
          %1211 = vxpose.xlu0.b32.cont [9/16] 0.0, 128
          %1212 = vxpose.xlu0.b32.cont [10/16] 0.0, 128
          %1213 = vxpose.xlu0.b32.cont [11/16] 0.0, 128
          %1214 = vxpose.xlu0.b32.cont [12/16] 0.0, 128
          %1215 = vxpose.xlu0.b32.cont [13/16] 0.0, 128
          %1216 = vxpose.xlu0.b32.cont [14/16] 0.0, 128
          %1217 = vxpose.xlu0.b32.cont [15/16] 0.0, 128
          %1218 = vxpose.xlu0.b32.end [16/16] 0.0, 128
          %v1219 = vpop.trf.xlu0
          %v1220 = vpop.trf.xlu0
          %v1221 = vpop.trf.xlu0
          %v1222 = vpop.trf.xlu0
          %v1223 = vpop.trf.xlu0
          %v1224 = vpop.trf.xlu0
          %v1225 = vpop.trf.xlu0
          %v1226 = vpop.trf.xlu0
          %v1227 = vpop.trf.xlu0
          %v1228 = vpop.trf.xlu0
          %v1229 = vpop.trf.xlu0
          %v1230 = vpop.trf.xlu0
          %v1231 = vpop.trf.xlu0
          %v1232 = vpop.trf.xlu0
          %v1233 = vpop.trf.xlu0
          %v1234 = vpop.trf.xlu0
          %v1235 = vpack.c.bf16 %v1123, %v1123
          %v1236 = vpack.c.bf16 %v1155, %v1155
          %v1237 = vpack.c.bf16 %v1187, %v1187
          %v1238 = vpack.c.bf16 %v1219, %v1219
          %1239 = vst.msk [vmem:[#allocation3] sm:$0xf] %vm1102, %v1235
          %1240 = vst.msk [vmem:[#allocation3 + $0x4] sm:$0xf] %vm1102, %v1236
          %1241 = vst.msk [vmem:[#allocation3 + $0x8] sm:$0xf] %vm1102, %v1237
          %1242 = vst.msk [vmem:[#allocation3 + $0xc] sm:$0xf] %vm1102, %v1238
        $region100: #{tpu_custom_call.1} parent=95 // pred_fallthru
          _
        %v1243 = vld [vmem:[%s646] sm:$0xff]
        %v1244 = vld [vmem:[%s3] sm:$0xf]
        %v1245 = vld [vmem:[%s3 + $0x4] sm:$0xf]
        %v1246 = vld [vmem:[%s3 + $0x8] sm:$0xf]
        %v1247 = vld [vmem:[%s3 + $0xc] sm:$0xf]
        %v1248 = vld [vmem:[%s3 + $0x10] sm:$0xf]
        %v1249 = vld [vmem:[%s3 + $0x14] sm:$0xf]
        %v1250 = vld [vmem:[%s3 + $0x18] sm:$0xf]
        %v1251 = vld [vmem:[%s3 + $0x1c] sm:$0xf]
        %v1252 = vld [vmem:[%s3 + $0x20] sm:$0xf]
        %v1253 = vld [vmem:[%s3 + $0x24] sm:$0xf]
        %v1254 = vld [vmem:[%s3 + $0x28] sm:$0xf]
        %v1255 = vld [vmem:[%s3 + $0x2c] sm:$0xf]
        %v1256 = vld [vmem:[%s3 + $0x30] sm:$0xf]
        %v1257 = vld [vmem:[%s3 + $0x34] sm:$0xf]
        %v1258 = vld [vmem:[%s3 + $0x38] sm:$0xf]
        %v1259 = vld [vmem:[%s3 + $0x3c] sm:$0xf]
        %v1260 = vpack.c.bf16 %v1243, %v1243
        %v1261 = vld [vmem:[%s4] sm:$0xff]
        %v1262 = vld [vmem:[%s4 + $0x8] sm:$0xff]
        %v1263 = vld [vmem:[%s4 + $0x10] sm:$0xff]
        %v1264 = vld [vmem:[%s4 + $0x18] sm:$0xff]
        %1266 = vset.pattern.permute.xlu0 0
        %1267 = vperm.xlu0 %1266, %v1261
        %v1268 = vpop.permute.xlu0 %1267
        %1271 = vset.pattern.permute.xlu0 0
        %1272 = vperm.xlu0 %1271, %v1262
        %v1273 = vpop.permute.xlu0 %1272
        %1276 = vset.pattern.permute.xlu0 0
        %1277 = vperm.xlu0 %1276, %v1263
        %v1278 = vpop.permute.xlu0 %1277
        %1281 = vset.pattern.permute.xlu0 0
        %1282 = vperm.xlu0 %1281, %v1264
        %v1283 = vpop.permute.xlu0 %1282
        %v1301 = vunpack.c.l.b16 %v1244
        %v1302 = vunpack.c.l.b16 %v1245
        %v1303 = vunpack.c.l.b16 %v1246
        %v1304 = vunpack.c.l.b16 %v1247
        %v1305 = vunpack.c.l.b16 %v1248
        %v1306 = vunpack.c.l.b16 %v1249
        %v1307 = vunpack.c.l.b16 %v1250
        %v1308 = vunpack.c.l.b16 %v1251
        %v1309 = vunpack.c.l.b16 %v1252
        %v1310 = vunpack.c.l.b16 %v1253
        %v1311 = vunpack.c.l.b16 %v1254
        %v1312 = vunpack.c.l.b16 %v1255
        %v1313 = vunpack.c.l.b16 %v1256
        %v1314 = vunpack.c.l.b16 %v1257
        %v1315 = vunpack.c.l.b16 %v1258
        %v1316 = vunpack.c.l.b16 %v1259
        %v1317 = vpack.c.b16 %v1302, %v1301
        %v1318 = vpack.c.b16 %v1304, %v1303
        %v1319 = vpack.c.b16 %v1306, %v1305
        %v1320 = vpack.c.b16 %v1308, %v1307
        %v1321 = vpack.c.b16 %v1310, %v1309
        %v1322 = vpack.c.b16 %v1312, %v1311
        %v1323 = vpack.c.b16 %v1314, %v1313
        %v1324 = vpack.c.b16 %v1316, %v1315
        %1333 = vxpose.xlu0.c.b16.start [1/8] %v1317, 128
        %1334 = vxpose.xlu0.c.b16.cont [2/8] %v1318, 128
        %1335 = vxpose.xlu0.c.b16.cont [3/8] 0, 128
        %1336 = vxpose.xlu0.c.b16.cont [4/8] 0, 128
        %1337 = vxpose.xlu0.c.b16.cont [5/8] 0, 128
        %1338 = vxpose.xlu0.c.b16.cont [6/8] 0, 128
        %1339 = vxpose.xlu0.c.b16.cont [7/8] 0, 128
        %1340 = vxpose.xlu0.c.b16.end [8/8] 0, 128
        %v1341 = vpop.trf.xlu0
        %v1342 = vpop.trf.xlu0
        %v1343 = vpop.trf.xlu0
        %v1344 = vpop.trf.xlu0
        %v1345 = vpop.trf.xlu0
        %v1346 = vpop.trf.xlu0
        %v1347 = vpop.trf.xlu0
        %v1348 = vpop.trf.xlu0
        %1349 = vxpose.xlu0.c.b16.start [1/8] %v1319, 128
        %1350 = vxpose.xlu0.c.b16.cont [2/8] %v1320, 128
        %1351 = vxpose.xlu0.c.b16.cont [3/8] 0, 128
        %1352 = vxpose.xlu0.c.b16.cont [4/8] 0, 128
        %1353 = vxpose.xlu0.c.b16.cont [5/8] 0, 128
        %1354 = vxpose.xlu0.c.b16.cont [6/8] 0, 128
        %1355 = vxpose.xlu0.c.b16.cont [7/8] 0, 128
        %1356 = vxpose.xlu0.c.b16.end [8/8] 0, 128
        %v1357 = vpop.trf.xlu0
        %v1358 = vpop.trf.xlu0
        %v1359 = vpop.trf.xlu0
        %v1360 = vpop.trf.xlu0
        %v1361 = vpop.trf.xlu0
        %v1362 = vpop.trf.xlu0
        %v1363 = vpop.trf.xlu0
        %v1364 = vpop.trf.xlu0
        %1365 = vxpose.xlu0.c.b16.start [1/8] %v1321, 128
        %1366 = vxpose.xlu0.c.b16.cont [2/8] %v1322, 128
        %1367 = vxpose.xlu0.c.b16.cont [3/8] 0, 128
        %1368 = vxpose.xlu0.c.b16.cont [4/8] 0, 128
        %1369 = vxpose.xlu0.c.b16.cont [5/8] 0, 128
        %1370 = vxpose.xlu0.c.b16.cont [6/8] 0, 128
        %1371 = vxpose.xlu0.c.b16.cont [7/8] 0, 128
        %1372 = vxpose.xlu0.c.b16.end [8/8] 0, 128
        %v1373 = vpop.trf.xlu0
        %v1374 = vpop.trf.xlu0
        %v1375 = vpop.trf.xlu0
        %v1376 = vpop.trf.xlu0
        %v1377 = vpop.trf.xlu0
        %v1378 = vpop.trf.xlu0
        %v1379 = vpop.trf.xlu0
        %v1380 = vpop.trf.xlu0
        %1381 = vxpose.xlu0.c.b16.start [1/8] %v1323, 128
        %1382 = vxpose.xlu0.c.b16.cont [2/8] %v1324, 128
        %1383 = vxpose.xlu0.c.b16.cont [3/8] 0, 128
        %1384 = vxpose.xlu0.c.b16.cont [4/8] 0, 128
        %1385 = vxpose.xlu0.c.b16.cont [5/8] 0, 128
        %1386 = vxpose.xlu0.c.b16.cont [6/8] 0, 128
        %1387 = vxpose.xlu0.c.b16.cont [7/8] 0, 128
        %1388 = vxpose.xlu0.c.b16.end [8/8] 0, 128
        %v1389 = vpop.trf.xlu0
        %v1390 = vpop.trf.xlu0
        %v1391 = vpop.trf.xlu0
        %v1392 = vpop.trf.xlu0
        %v1393 = vpop.trf.xlu0
        %v1394 = vpop.trf.xlu0
        %v1395 = vpop.trf.xlu0
        %v1396 = vpop.trf.xlu0
        %v1401 = vunpack.c.l.b16 %v1341
        %v1402 = vunpack.c.l.b16 %v1357
        %v1403 = vunpack.c.l.b16 %v1373
        %v1404 = vunpack.c.l.b16 %v1389
        %v1405 = vpack.c.b16 %v1402, %v1401
        %v1406 = vpack.c.b16 %v1404, %v1403
        %vm1407 = vcmask 261120
        %v1409 = vsel %vm1407, %v1405, 0
        %v1412 = vsel %vm1407, %v1406, 0
        %v1415 = vsel %vm1407, %v1260, 0
        %1417 = vmatprep.subr.bf16.mxu0 0
        %1418 = vmatpush1.bf16.xpose.msra.mxu0 0
        %1419 = vmatprep.subr.bf16.mxu0 0
        %1420 = vmatpush1.bf16.xpose.msra.mxu0 0
        %1421 = vmatprep.subr.bf16.mxu0 0
        %1422 = vmatpush1.bf16.xpose.msra.mxu0 0
        %1423 = vmatprep.subr.bf16.mxu0 0
        %1424 = vmatpush1.bf16.xpose.msra.mxu0 0
        %1425 = vmatprep.subr.bf16.mxu0 0
        %1426 = vmatpush1.bf16.xpose.msra.mxu0 0
        %1427 = vmatprep.subr.bf16.mxu0 0
        %1428 = vmatpush1.bf16.xpose.msra.mxu0 0
        %1429 = vmatprep.subr.bf16.mxu0 0
        %1430 = vmatpush1.bf16.xpose.msra.mxu0 0
        %1431 = vmatprep.subr.bf16.mxu0 0
        %1432 = vmatpush1.bf16.xpose.msra.mxu0 %v1415
        %1433 = vmatprep.subr.bf16.mxu0 0
        %1434 = vmatpush2.bf16.xpose.msra.mxu0 0
        %1435 = vmatprep.subr.bf16.mxu0 0
        %1436 = vmatpush2.bf16.xpose.msra.mxu0 0
        %1437 = vmatprep.subr.bf16.mxu0 0
        %1438 = vmatpush2.bf16.xpose.msra.mxu0 0
        %1439 = vmatprep.subr.bf16.mxu0 0
        %1440 = vmatpush2.bf16.xpose.msra.mxu0 0
        %1441 = vmatprep.subr.bf16.mxu0 0
        %1442 = vmatpush2.bf16.xpose.msra.mxu0 0
        %1443 = vmatprep.subr.bf16.mxu0 0
        %1444 = vmatpush2.bf16.xpose.msra.mxu0 0
        %1445 = vmatprep.subr.bf16.mxu0 0
        %1446 = vmatpush2.bf16.xpose.msra.mxu0 0
        %1447 = vmatprep.subr.bf16.mxu0 0
        %1448 = vmatpush2.bf16.xpose.msra.mxu0 0
        %1449 = vmatprep.mubr.bf16.mxu0 0
        %1450 = vmatmul.mubr.bf16.gmra.mxu0 %v1409
        %v1451 = vpop.f32.mrf.mxu0
        %v1452 = vadd.f32 %v1268, %v1451
        %v1453 = vpop.f32.mrf.mxu0
        %v1454 = vpop.f32.mrf.mxu0
        %v1455 = vadd.f32 %v1273, %v1454
        %v1456 = vpop.f32.mrf.mxu0
        %1457 = vmatprep.mubr.bf16.mxu0 0
        %1458 = vmatmul.mubr.bf16.gmra.mxu0 %v1412
        %v1459 = vpop.f32.mrf.mxu0
        %v1460 = vadd.f32 %v1278, %v1459
        %v1461 = vpop.f32.mrf.mxu0
        %v1462 = vpop.f32.mrf.mxu0
        %v1463 = vadd.f32 %v1283, %v1462
        %v1464 = vpop.f32.mrf.mxu0
        %1465 = vdwg.mxu0
        %1466 = vxpose.xlu0.b32.start [1/16] %v1452, 128
        %1467 = vxpose.xlu0.b32.cont [2/16] 0.0, 128
        %1468 = vxpose.xlu0.b32.cont [3/16] 0.0, 128
        %1469 = vxpose.xlu0.b32.cont [4/16] 0.0, 128
        %1470 = vxpose.xlu0.b32.cont [5/16] 0.0, 128
        %1471 = vxpose.xlu0.b32.cont [6/16] 0.0, 128
        %1472 = vxpose.xlu0.b32.cont [7/16] 0.0, 128
        %1473 = vxpose.xlu0.b32.cont [8/16] 0.0, 128
        %1474 = vxpose.xlu0.b32.cont [9/16] 0.0, 128
        %1475 = vxpose.xlu0.b32.cont [10/16] 0.0, 128
        %1476 = vxpose.xlu0.b32.cont [11/16] 0.0, 128
        %1477 = vxpose.xlu0.b32.cont [12/16] 0.0, 128
        %1478 = vxpose.xlu0.b32.cont [13/16] 0.0, 128
        %1479 = vxpose.xlu0.b32.cont [14/16] 0.0, 128
        %1480 = vxpose.xlu0.b32.cont [15/16] 0.0, 128
        %1481 = vxpose.xlu0.b32.end [16/16] 0.0, 128
        %v1482 = vpop.trf.xlu0
        %v1483 = vpop.trf.xlu0
        %v1484 = vpop.trf.xlu0
        %v1485 = vpop.trf.xlu0
        %v1486 = vpop.trf.xlu0
        %v1487 = vpop.trf.xlu0
        %v1488 = vpop.trf.xlu0
        %v1489 = vpop.trf.xlu0
        %v1490 = vpop.trf.xlu0
        %v1491 = vpop.trf.xlu0
        %v1492 = vpop.trf.xlu0
        %v1493 = vpop.trf.xlu0
        %v1494 = vpop.trf.xlu0
        %v1495 = vpop.trf.xlu0
        %v1496 = vpop.trf.xlu0
        %v1497 = vpop.trf.xlu0
        %1498 = vxpose.xlu0.b32.start [1/16] %v1455, 128
        %1499 = vxpose.xlu0.b32.cont [2/16] 0.0, 128
        %1500 = vxpose.xlu0.b32.cont [3/16] 0.0, 128
        %1501 = vxpose.xlu0.b32.cont [4/16] 0.0, 128
        %1502 = vxpose.xlu0.b32.cont [5/16] 0.0, 128
        %1503 = vxpose.xlu0.b32.cont [6/16] 0.0, 128
        %1504 = vxpose.xlu0.b32.cont [7/16] 0.0, 128
        %1505 = vxpose.xlu0.b32.cont [8/16] 0.0, 128
        %1506 = vxpose.xlu0.b32.cont [9/16] 0.0, 128
        %1507 = vxpose.xlu0.b32.cont [10/16] 0.0, 128
        %1508 = vxpose.xlu0.b32.cont [11/16] 0.0, 128
        %1509 = vxpose.xlu0.b32.cont [12/16] 0.0, 128
        %1510 = vxpose.xlu0.b32.cont [13/16] 0.0, 128
        %1511 = vxpose.xlu0.b32.cont [14/16] 0.0, 128
        %1512 = vxpose.xlu0.b32.cont [15/16] 0.0, 128
        %1513 = vxpose.xlu0.b32.end [16/16] 0.0, 128
        %v1514 = vpop.trf.xlu0
        %v1515 = vpop.trf.xlu0
        %v1516 = vpop.trf.xlu0
        %v1517 = vpop.trf.xlu0
        %v1518 = vpop.trf.xlu0
        %v1519 = vpop.trf.xlu0
        %v1520 = vpop.trf.xlu0
        %v1521 = vpop.trf.xlu0
        %v1522 = vpop.trf.xlu0
        %v1523 = vpop.trf.xlu0
        %v1524 = vpop.trf.xlu0
        %v1525 = vpop.trf.xlu0
        %v1526 = vpop.trf.xlu0
        %v1527 = vpop.trf.xlu0
        %v1528 = vpop.trf.xlu0
        %v1529 = vpop.trf.xlu0
        %1530 = vxpose.xlu0.b32.start [1/16] %v1460, 128
        %1531 = vxpose.xlu0.b32.cont [2/16] 0.0, 128
        %1532 = vxpose.xlu0.b32.cont [3/16] 0.0, 128
        %1533 = vxpose.xlu0.b32.cont [4/16] 0.0, 128
        %1534 = vxpose.xlu0.b32.cont [5/16] 0.0, 128
        %1535 = vxpose.xlu0.b32.cont [6/16] 0.0, 128
        %1536 = vxpose.xlu0.b32.cont [7/16] 0.0, 128
        %1537 = vxpose.xlu0.b32.cont [8/16] 0.0, 128
        %1538 = vxpose.xlu0.b32.cont [9/16] 0.0, 128
        %1539 = vxpose.xlu0.b32.cont [10/16] 0.0, 128
        %1540 = vxpose.xlu0.b32.cont [11/16] 0.0, 128
        %1541 = vxpose.xlu0.b32.cont [12/16] 0.0, 128
        %1542 = vxpose.xlu0.b32.cont [13/16] 0.0, 128
        %1543 = vxpose.xlu0.b32.cont [14/16] 0.0, 128
        %1544 = vxpose.xlu0.b32.cont [15/16] 0.0, 128
        %1545 = vxpose.xlu0.b32.end [16/16] 0.0, 128
        %v1546 = vpop.trf.xlu0
        %v1547 = vpop.trf.xlu0
        %v1548 = vpop.trf.xlu0
        %v1549 = vpop.trf.xlu0
        %v1550 = vpop.trf.xlu0
        %v1551 = vpop.trf.xlu0
        %v1552 = vpop.trf.xlu0
        %v1553 = vpop.trf.xlu0
        %v1554 = vpop.trf.xlu0
        %v1555 = vpop.trf.xlu0
        %v1556 = vpop.trf.xlu0
        %v1557 = vpop.trf.xlu0
        %v1558 = vpop.trf.xlu0
        %v1559 = vpop.trf.xlu0
        %v1560 = vpop.trf.xlu0
        %v1561 = vpop.trf.xlu0
        %1562 = vxpose.xlu0.b32.start [1/16] %v1463, 128
        %1563 = vxpose.xlu0.b32.cont [2/16] 0.0, 128
        %1564 = vxpose.xlu0.b32.cont [3/16] 0.0, 128
        %1565 = vxpose.xlu0.b32.cont [4/16] 0.0, 128
        %1566 = vxpose.xlu0.b32.cont [5/16] 0.0, 128
        %1567 = vxpose.xlu0.b32.cont [6/16] 0.0, 128
        %1568 = vxpose.xlu0.b32.cont [7/16] 0.0, 128
        %1569 = vxpose.xlu0.b32.cont [8/16] 0.0, 128
        %1570 = vxpose.xlu0.b32.cont [9/16] 0.0, 128
        %1571 = vxpose.xlu0.b32.cont [10/16] 0.0, 128
        %1572 = vxpose.xlu0.b32.cont [11/16] 0.0, 128
        %1573 = vxpose.xlu0.b32.cont [12/16] 0.0, 128
        %1574 = vxpose.xlu0.b32.cont [13/16] 0.0, 128
        %1575 = vxpose.xlu0.b32.cont [14/16] 0.0, 128
        %1576 = vxpose.xlu0.b32.cont [15/16] 0.0, 128
        %1577 = vxpose.xlu0.b32.end [16/16] 0.0, 128
        %v1578 = vpop.trf.xlu0
        %v1579 = vpop.trf.xlu0
        %v1580 = vpop.trf.xlu0
        %v1581 = vpop.trf.xlu0
        %v1582 = vpop.trf.xlu0
        %v1583 = vpop.trf.xlu0
        %v1584 = vpop.trf.xlu0
        %v1585 = vpop.trf.xlu0
        %v1586 = vpop.trf.xlu0
        %v1587 = vpop.trf.xlu0
        %v1588 = vpop.trf.xlu0
        %v1589 = vpop.trf.xlu0
        %v1590 = vpop.trf.xlu0
        %v1591 = vpop.trf.xlu0
        %v1592 = vpop.trf.xlu0
        %v1593 = vpop.trf.xlu0
        %v1594 = vpack.c.bf16 %v1482, %v1482
        %v1595 = vpack.c.bf16 %v1514, %v1514
        %v1596 = vpack.c.bf16 %v1546, %v1546
        %v1597 = vpack.c.bf16 %v1578, %v1578
        %v1598 = vld [vmem:[#allocation2] sm:$0xf]
        %v1599 = vld [vmem:[#allocation2 + $0x4] sm:$0xf]
        %v1600 = vld [vmem:[#allocation2 + $0x8] sm:$0xf]
        %v1601 = vld [vmem:[#allocation2 + $0xc] sm:$0xf]
        %v1602 = vld [vmem:[%s653] sm:$0x1]
        %v1604 = vlaneseq
        %v1605 = vshrl.u32 %v1604, 7
        %v1606 = vsub.s32 0, %v1605
        %v1607 = vrot.slane %v1602, %v1606
        %vm1609 = vcmask 64512
        %v1611 = vsel %vm1609, %v1594, 0
        %vm1613 = vcmask 1043456
        %v1615 = vsel %vm1613, %v1598, 0
        %1617 = vmatprep.subr.bf16.mxu0 0
        %1618 = vmatpush1.bf16.msra.mxu0 0
        %1619 = vmatprep.subr.bf16.mxu0 0
        %1620 = vmatpush1.bf16.msra.mxu0 0
        %1621 = vmatprep.subr.bf16.mxu0 0
        %1622 = vmatpush1.bf16.msra.mxu0 0
        %1623 = vmatprep.subr.bf16.mxu0 0
        %1624 = vmatpush1.bf16.msra.mxu0 0
        %1625 = vmatprep.subr.bf16.mxu0 0
        %1626 = vmatpush1.bf16.msra.mxu0 0
        %1627 = vmatprep.subr.bf16.mxu0 0
        %1628 = vmatpush1.bf16.msra.mxu0 0
        %1629 = vmatprep.subr.bf16.mxu0 0
        %1630 = vmatpush1.bf16.msra.mxu0 0
        %1631 = vmatprep.subr.bf16.mxu0 0
        %1632 = vmatpush1.bf16.msra.mxu0 %v1615
        %1633 = vmatprep.subr.bf16.mxu0 0
        %1634 = vmatpush2.bf16.msra.mxu0 0
        %1635 = vmatprep.subr.bf16.mxu0 0
        %1636 = vmatpush2.bf16.msra.mxu0 0
        %1637 = vmatprep.subr.bf16.mxu0 0
        %1638 = vmatpush2.bf16.msra.mxu0 0
        %1639 = vmatprep.subr.bf16.mxu0 0
        %1640 = vmatpush2.bf16.msra.mxu0 0
        %1641 = vmatprep.subr.bf16.mxu0 0
        %1642 = vmatpush2.bf16.msra.mxu0 0
        %1643 = vmatprep.subr.bf16.mxu0 0
        %1644 = vmatpush2.bf16.msra.mxu0 0
        %1645 = vmatprep.subr.bf16.mxu0 0
        %1646 = vmatpush2.bf16.msra.mxu0 0
        %1647 = vmatprep.subr.bf16.mxu0 0
        %1648 = vmatpush2.bf16.msra.mxu0 0
        %1649 = vmatprep.mubr.bf16.mxu0 0
        %1650 = vmatmul.mubr.bf16.gmra.mxu0 %v1611
        %v1651 = vpop.f32.mrf.mxu0
        %v1652 = vadd.f32 %v1607, %v1651
        %v1653 = vpop.f32.mrf.mxu0
        %v1654 = vpop.f32.mrf.mxu0
        %v1655 = vpop.f32.mrf.mxu0
        %1656 = vdwg.mxu0
        %v1658 = vsel %vm1609, %v1595, 0
        %v1661 = vsel %vm1613, %v1599, 0
        %1663 = vmatprep.subr.bf16.mxu0 0
        %1664 = vmatpush1.bf16.msra.mxu0 0
        %1665 = vmatprep.subr.bf16.mxu0 0
        %1666 = vmatpush1.bf16.msra.mxu0 0
        %1667 = vmatprep.subr.bf16.mxu0 0
        %1668 = vmatpush1.bf16.msra.mxu0 0
        %1669 = vmatprep.subr.bf16.mxu0 0
        %1670 = vmatpush1.bf16.msra.mxu0 0
        %1671 = vmatprep.subr.bf16.mxu0 0
        %1672 = vmatpush1.bf16.msra.mxu0 0
        %1673 = vmatprep.subr.bf16.mxu0 0
        %1674 = vmatpush1.bf16.msra.mxu0 0
        %1675 = vmatprep.subr.bf16.mxu0 0
        %1676 = vmatpush1.bf16.msra.mxu0 0
        %1677 = vmatprep.subr.bf16.mxu0 0
        %1678 = vmatpush1.bf16.msra.mxu0 %v1661
        %1679 = vmatprep.subr.bf16.mxu0 0
        %1680 = vmatpush2.bf16.msra.mxu0 0
        %1681 = vmatprep.subr.bf16.mxu0 0
        %1682 = vmatpush2.bf16.msra.mxu0 0
        %1683 = vmatprep.subr.bf16.mxu0 0
        %1684 = vmatpush2.bf16.msra.mxu0 0
        %1685 = vmatprep.subr.bf16.mxu0 0
        %1686 = vmatpush2.bf16.msra.mxu0 0
        %1687 = vmatprep.subr.bf16.mxu0 0
        %1688 = vmatpush2.bf16.msra.mxu0 0
        %1689 = vmatprep.subr.bf16.mxu0 0
        %1690 = vmatpush2.bf16.msra.mxu0 0
        %1691 = vmatprep.subr.bf16.mxu0 0
        %1692 = vmatpush2.bf16.msra.mxu0 0
        %1693 = vmatprep.subr.bf16.mxu0 0
        %1694 = vmatpush2.bf16.msra.mxu0 0
        %1695 = vmatprep.mubr.bf16.mxu0 0
        %1696 = vmatmul.mubr.bf16.gmra.mxu0 %v1658
        %v1697 = vpop.f32.mrf.mxu0
        %v1698 = vadd.f32 %v1607, %v1697
        %v1699 = vpop.f32.mrf.mxu0
        %v1700 = vpop.f32.mrf.mxu0
        %v1701 = vpop.f32.mrf.mxu0
        %1702 = vdwg.mxu0
        %v1704 = vsel %vm1609, %v1596, 0
        %v1707 = vsel %vm1613, %v1600, 0
        %1709 = vmatprep.subr.bf16.mxu0 0
        %1710 = vmatpush1.bf16.msra.mxu0 0
        %1711 = vmatprep.subr.bf16.mxu0 0
        %1712 = vmatpush1.bf16.msra.mxu0 0
        %1713 = vmatprep.subr.bf16.mxu0 0
        %1714 = vmatpush1.bf16.msra.mxu0 0
        %1715 = vmatprep.subr.bf16.mxu0 0
        %1716 = vmatpush1.bf16.msra.mxu0 0
        %1717 = vmatprep.subr.bf16.mxu0 0
        %1718 = vmatpush1.bf16.msra.mxu0 0
        %1719 = vmatprep.subr.bf16.mxu0 0
        %1720 = vmatpush1.bf16.msra.mxu0 0
        %1721 = vmatprep.subr.bf16.mxu0 0
        %1722 = vmatpush1.bf16.msra.mxu0 0
        %1723 = vmatprep.subr.bf16.mxu0 0
        %1724 = vmatpush1.bf16.msra.mxu0 %v1707
        %1725 = vmatprep.subr.bf16.mxu0 0
        %1726 = vmatpush2.bf16.msra.mxu0 0
        %1727 = vmatprep.subr.bf16.mxu0 0
        %1728 = vmatpush2.bf16.msra.mxu0 0
        %1729 = vmatprep.subr.bf16.mxu0 0
        %1730 = vmatpush2.bf16.msra.mxu0 0
        %1731 = vmatprep.subr.bf16.mxu0 0
        %1732 = vmatpush2.bf16.msra.mxu0 0
        %1733 = vmatprep.subr.bf16.mxu0 0
        %1734 = vmatpush2.bf16.msra.mxu0 0
        %1735 = vmatprep.subr.bf16.mxu0 0
        %1736 = vmatpush2.bf16.msra.mxu0 0
        %1737 = vmatprep.subr.bf16.mxu0 0
        %1738 = vmatpush2.bf16.msra.mxu0 0
        %1739 = vmatprep.subr.bf16.mxu0 0
        %1740 = vmatpush2.bf16.msra.mxu0 0
        %1741 = vmatprep.mubr.bf16.mxu0 0
        %1742 = vmatmul.mubr.bf16.gmra.mxu0 %v1704
        %v1743 = vpop.f32.mrf.mxu0
        %v1744 = vadd.f32 %v1607, %v1743
        %v1745 = vpop.f32.mrf.mxu0
        %v1746 = vpop.f32.mrf.mxu0
        %v1747 = vpop.f32.mrf.mxu0
        %1748 = vdwg.mxu0
        %v1750 = vsel %vm1609, %v1597, 0
        %v1753 = vsel %vm1613, %v1601, 0
        %1755 = vmatprep.subr.bf16.mxu0 0
        %1756 = vmatpush1.bf16.msra.mxu0 0
        %1757 = vmatprep.subr.bf16.mxu0 0
        %1758 = vmatpush1.bf16.msra.mxu0 0
        %1759 = vmatprep.subr.bf16.mxu0 0
        %1760 = vmatpush1.bf16.msra.mxu0 0
        %1761 = vmatprep.subr.bf16.mxu0 0
        %1762 = vmatpush1.bf16.msra.mxu0 0
        %1763 = vmatprep.subr.bf16.mxu0 0
        %1764 = vmatpush1.bf16.msra.mxu0 0
        %1765 = vmatprep.subr.bf16.mxu0 0
        %1766 = vmatpush1.bf16.msra.mxu0 0
        %1767 = vmatprep.subr.bf16.mxu0 0
        %1768 = vmatpush1.bf16.msra.mxu0 0
        %1769 = vmatprep.subr.bf16.mxu0 0
        %1770 = vmatpush1.bf16.msra.mxu0 %v1753
        %1771 = vmatprep.subr.bf16.mxu0 0
        %1772 = vmatpush2.bf16.msra.mxu0 0
        %1773 = vmatprep.subr.bf16.mxu0 0
        %1774 = vmatpush2.bf16.msra.mxu0 0
        %1775 = vmatprep.subr.bf16.mxu0 0
        %1776 = vmatpush2.bf16.msra.mxu0 0
        %1777 = vmatprep.subr.bf16.mxu0 0
        %1778 = vmatpush2.bf16.msra.mxu0 0
        %1779 = vmatprep.subr.bf16.mxu0 0
        %1780 = vmatpush2.bf16.msra.mxu0 0
        %1781 = vmatprep.subr.bf16.mxu0 0
        %1782 = vmatpush2.bf16.msra.mxu0 0
        %1783 = vmatprep.subr.bf16.mxu0 0
        %1784 = vmatpush2.bf16.msra.mxu0 0
        %1785 = vmatprep.subr.bf16.mxu0 0
        %1786 = vmatpush2.bf16.msra.mxu0 0
        %1787 = vmatprep.mubr.bf16.mxu0 0
        %1788 = vmatmul.mubr.bf16.gmra.mxu0 %v1750
        %v1789 = vpop.f32.mrf.mxu0
        %v1790 = vadd.f32 %v1607, %v1789
        %v1791 = vpop.f32.mrf.mxu0
        %v1792 = vpop.f32.mrf.mxu0
        %v1793 = vpop.f32.mrf.mxu0
        %1794 = vdwg.mxu0
        %v1795 = vsel %vm1609, %v1652, -inf
        %1796 = vmax.xlane.f32.xlu0 %v1795
        %v1797 = vpop.xlane.xlu0 %1796
        %v1798 = vsel %vm1609, %v1698, -inf
        %1799 = vmax.xlane.f32.xlu0 %v1798
        %v1800 = vpop.xlane.xlu0 %1799
        %v1801 = vsel %vm1609, %v1744, -inf
        %1802 = vmax.xlane.f32.xlu0 %v1801
        %v1803 = vpop.xlane.xlu0 %1802
        %v1804 = vsel %vm1609, %v1790, -inf
        %1805 = vmax.xlane.f32.xlu0 %v1804
        %v1806 = vpop.xlane.xlu0 %1805
        %v1807 = vsub.f32 %v1652, %v1797
        %v1808 = vsub.f32 %v1698, %v1800
        %v1809 = vsub.f32 %v1744, %v1803
        %v1810 = vsub.f32 %v1790, %v1806
        %v1811 = vmul.f32 %v1807, 1.442695
        %v1812 = vpow.pop %v1811
        %v1813 = vmul.f32 %v1808, 1.442695
        %v1814 = vpow.pop %v1813
        %v1815 = vmul.f32 %v1809, 1.442695
        %v1816 = vpow.pop %v1815
        %v1817 = vmul.f32 %v1810, 1.442695
        %v1818 = vpow.pop %v1817
        %v1819 = vsel %vm1609, %v1812, 0.0
        %1820 = vadd.xlane.f32.xlu0 %v1819
        %v1821 = vpop.xlane.xlu0 %1820
        %v1822 = vsel %vm1609, %v1814, 0.0
        %1823 = vadd.xlane.f32.xlu0 %v1822
        %v1824 = vpop.xlane.xlu0 %1823
        %v1825 = vsel %vm1609, %v1816, 0.0
        %1826 = vadd.xlane.f32.xlu0 %v1825
        %v1827 = vpop.xlane.xlu0 %1826
        %v1828 = vsel %vm1609, %v1818, 0.0
        %1829 = vadd.xlane.f32.xlu0 %v1828
        %v1830 = vpop.xlane.xlu0 %1829
        %v1831 = vrcp.pop %v1821
        %v1832 = vrcp.pop %v1824
        %v1833 = vrcp.pop %v1827
        %v1834 = vrcp.pop %v1830
        %v1835 = vmul.f32 %v1812, %v1831
        %v1836 = vmul.f32 %v1814, %v1832
        %v1837 = vmul.f32 %v1816, %v1833
        %v1838 = vmul.f32 %v1818, %v1834
        %v1839 = vpack.c.bf16 %v1835, %v1835
        %v1840 = vpack.c.bf16 %v1836, %v1836
        %v1841 = vpack.c.bf16 %v1837, %v1837
        %v1842 = vpack.c.bf16 %v1838, %v1838
        %v1843 = vld [vmem:[#allocation3] sm:$0xf]
        %v1844 = vld [vmem:[#allocation3 + $0x4] sm:$0xf]
        %v1845 = vld [vmem:[#allocation3 + $0x8] sm:$0xf]
        %v1846 = vld [vmem:[#allocation3 + $0xc] sm:$0xf]
        %v1848 = vsel %vm1609, %v1839, 0
        %v1851 = vsel %vm1613, %v1843, 0
        %1853 = vmatprep.subr.bf16.mxu0 0
        %1854 = vmatpush1.bf16.msra.mxu0 0
        %1855 = vmatprep.subr.bf16.mxu0 0
        %1856 = vmatpush1.bf16.msra.mxu0 0
        %1857 = vmatprep.subr.bf16.mxu0 0
        %1858 = vmatpush1.bf16.msra.mxu0 0
        %1859 = vmatprep.subr.bf16.mxu0 0
        %1860 = vmatpush1.bf16.msra.mxu0 0
        %1861 = vmatprep.subr.bf16.mxu0 0
        %1862 = vmatpush1.bf16.msra.mxu0 0
        %1863 = vmatprep.subr.bf16.mxu0 0
        %1864 = vmatpush1.bf16.msra.mxu0 0
        %1865 = vmatprep.subr.bf16.mxu0 0
        %1866 = vmatpush1.bf16.msra.mxu0 0
        %1867 = vmatprep.subr.bf16.mxu0 0
        %1868 = vmatpush1.bf16.msra.mxu0 %v1851
        %1869 = vmatprep.subr.bf16.mxu0 0
        %1870 = vmatpush2.bf16.msra.mxu0 0
        %1871 = vmatprep.subr.bf16.mxu0 0
        %1872 = vmatpush2.bf16.msra.mxu0 0
        %1873 = vmatprep.subr.bf16.mxu0 0
        %1874 = vmatpush2.bf16.msra.mxu0 0
        %1875 = vmatprep.subr.bf16.mxu0 0
        %1876 = vmatpush2.bf16.msra.mxu0 0
        %1877 = vmatprep.subr.bf16.mxu0 0
        %1878 = vmatpush2.bf16.msra.mxu0 0
        %1879 = vmatprep.subr.bf16.mxu0 0
        %1880 = vmatpush2.bf16.msra.mxu0 0
        %1881 = vmatprep.subr.bf16.mxu0 0
        %1882 = vmatpush2.bf16.msra.mxu0 0
        %1883 = vmatprep.subr.bf16.mxu0 0
        %1884 = vmatpush2.bf16.msra.mxu0 0
        %1885 = vmatprep.mubr.bf16.mxu0 0
        %1886 = vmatmul.mubr.bf16.gmra.mxu0 %v1848
        %v1887 = vpop.f32.mrf.mxu0
        %v1888 = vadd.f32 0.0, %v1887
        %v1889 = vpop.f32.mrf.mxu0
        %v1890 = vpop.f32.mrf.mxu0
        %v1891 = vpop.f32.mrf.mxu0
        %1892 = vdwg.mxu0
        %v1894 = vsel %vm1609, %v1840, 0
        %v1897 = vsel %vm1613, %v1844, 0
        %1899 = vmatprep.subr.bf16.mxu0 0
        %1900 = vmatpush1.bf16.msra.mxu0 0
        %1901 = vmatprep.subr.bf16.mxu0 0
        %1902 = vmatpush1.bf16.msra.mxu0 0
        %1903 = vmatprep.subr.bf16.mxu0 0
        %1904 = vmatpush1.bf16.msra.mxu0 0
        %1905 = vmatprep.subr.bf16.mxu0 0
        %1906 = vmatpush1.bf16.msra.mxu0 0
        %1907 = vmatprep.subr.bf16.mxu0 0
        %1908 = vmatpush1.bf16.msra.mxu0 0
        %1909 = vmatprep.subr.bf16.mxu0 0
        %1910 = vmatpush1.bf16.msra.mxu0 0
        %1911 = vmatprep.subr.bf16.mxu0 0
        %1912 = vmatpush1.bf16.msra.mxu0 0
        %1913 = vmatprep.subr.bf16.mxu0 0
        %1914 = vmatpush1.bf16.msra.mxu0 %v1897
        %1915 = vmatprep.subr.bf16.mxu0 0
        %1916 = vmatpush2.bf16.msra.mxu0 0
        %1917 = vmatprep.subr.bf16.mxu0 0
        %1918 = vmatpush2.bf16.msra.mxu0 0
        %1919 = vmatprep.subr.bf16.mxu0 0
        %1920 = vmatpush2.bf16.msra.mxu0 0
        %1921 = vmatprep.subr.bf16.mxu0 0
        %1922 = vmatpush2.bf16.msra.mxu0 0
        %1923 = vmatprep.subr.bf16.mxu0 0
        %1924 = vmatpush2.bf16.msra.mxu0 0
        %1925 = vmatprep.subr.bf16.mxu0 0
        %1926 = vmatpush2.bf16.msra.mxu0 0
        %1927 = vmatprep.subr.bf16.mxu0 0
        %1928 = vmatpush2.bf16.msra.mxu0 0
        %1929 = vmatprep.subr.bf16.mxu0 0
        %1930 = vmatpush2.bf16.msra.mxu0 0
        %1931 = vmatprep.mubr.bf16.mxu0 0
        %1932 = vmatmul.mubr.bf16.gmra.mxu0 %v1894
        %v1933 = vpop.f32.mrf.mxu0
        %v1934 = vadd.f32 0.0, %v1933
        %v1935 = vpop.f32.mrf.mxu0
        %v1936 = vpop.f32.mrf.mxu0
        %v1937 = vpop.f32.mrf.mxu0
        %1938 = vdwg.mxu0
        %v1940 = vsel %vm1609, %v1841, 0
        %v1943 = vsel %vm1613, %v1845, 0
        %1945 = vmatprep.subr.bf16.mxu0 0
        %1946 = vmatpush1.bf16.msra.mxu0 0
        %1947 = vmatprep.subr.bf16.mxu0 0
        %1948 = vmatpush1.bf16.msra.mxu0 0
        %1949 = vmatprep.subr.bf16.mxu0 0
        %1950 = vmatpush1.bf16.msra.mxu0 0
        %1951 = vmatprep.subr.bf16.mxu0 0
        %1952 = vmatpush1.bf16.msra.mxu0 0
        %1953 = vmatprep.subr.bf16.mxu0 0
        %1954 = vmatpush1.bf16.msra.mxu0 0
        %1955 = vmatprep.subr.bf16.mxu0 0
        %1956 = vmatpush1.bf16.msra.mxu0 0
        %1957 = vmatprep.subr.bf16.mxu0 0
        %1958 = vmatpush1.bf16.msra.mxu0 0
        %1959 = vmatprep.subr.bf16.mxu0 0
        %1960 = vmatpush1.bf16.msra.mxu0 %v1943
        %1961 = vmatprep.subr.bf16.mxu0 0
        %1962 = vmatpush2.bf16.msra.mxu0 0
        %1963 = vmatprep.subr.bf16.mxu0 0
        %1964 = vmatpush2.bf16.msra.mxu0 0
        %1965 = vmatprep.subr.bf16.mxu0 0
        %1966 = vmatpush2.bf16.msra.mxu0 0
        %1967 = vmatprep.subr.bf16.mxu0 0
        %1968 = vmatpush2.bf16.msra.mxu0 0
        %1969 = vmatprep.subr.bf16.mxu0 0
        %1970 = vmatpush2.bf16.msra.mxu0 0
        %1971 = vmatprep.subr.bf16.mxu0 0
        %1972 = vmatpush2.bf16.msra.mxu0 0
        %1973 = vmatprep.subr.bf16.mxu0 0
        %1974 = vmatpush2.bf16.msra.mxu0 0
        %1975 = vmatprep.subr.bf16.mxu0 0
        %1976 = vmatpush2.bf16.msra.mxu0 0
        %1977 = vmatprep.mubr.bf16.mxu0 0
        %1978 = vmatmul.mubr.bf16.gmra.mxu0 %v1940
        %v1979 = vpop.f32.mrf.mxu0
        %v1980 = vadd.f32 0.0, %v1979
        %v1981 = vpop.f32.mrf.mxu0
        %v1982 = vpop.f32.mrf.mxu0
        %v1983 = vpop.f32.mrf.mxu0
        %1984 = vdwg.mxu0
        %v1986 = vsel %vm1609, %v1842, 0
        %v1989 = vsel %vm1613, %v1846, 0
        %1991 = vmatprep.subr.bf16.mxu0 0
        %1992 = vmatpush1.bf16.msra.mxu0 0
        %1993 = vmatprep.subr.bf16.mxu0 0
        %1994 = vmatpush1.bf16.msra.mxu0 0
        %1995 = vmatprep.subr.bf16.mxu0 0
        %1996 = vmatpush1.bf16.msra.mxu0 0
        %1997 = vmatprep.subr.bf16.mxu0 0
        %1998 = vmatpush1.bf16.msra.mxu0 0
        %1999 = vmatprep.subr.bf16.mxu0 0
        %2000 = vmatpush1.bf16.msra.mxu0 0
        %2001 = vmatprep.subr.bf16.mxu0 0
        %2002 = vmatpush1.bf16.msra.mxu0 0
        %2003 = vmatprep.subr.bf16.mxu0 0
        %2004 = vmatpush1.bf16.msra.mxu0 0
        %2005 = vmatprep.subr.bf16.mxu0 0
        %2006 = vmatpush1.bf16.msra.mxu0 %v1989
        %2007 = vmatprep.subr.bf16.mxu0 0
        %2008 = vmatpush2.bf16.msra.mxu0 0
        %2009 = vmatprep.subr.bf16.mxu0 0
        %2010 = vmatpush2.bf16.msra.mxu0 0
        %2011 = vmatprep.subr.bf16.mxu0 0
        %2012 = vmatpush2.bf16.msra.mxu0 0
        %2013 = vmatprep.subr.bf16.mxu0 0
        %2014 = vmatpush2.bf16.msra.mxu0 0
        %2015 = vmatprep.subr.bf16.mxu0 0
        %2016 = vmatpush2.bf16.msra.mxu0 0
        %2017 = vmatprep.subr.bf16.mxu0 0
        %2018 = vmatpush2.bf16.msra.mxu0 0
        %2019 = vmatprep.subr.bf16.mxu0 0
        %2020 = vmatpush2.bf16.msra.mxu0 0
        %2021 = vmatprep.subr.bf16.mxu0 0
        %2022 = vmatpush2.bf16.msra.mxu0 0
        %2023 = vmatprep.mubr.bf16.mxu0 0
        %2024 = vmatmul.mubr.bf16.gmra.mxu0 %v1986
        %v2025 = vpop.f32.mrf.mxu0
        %v2026 = vadd.f32 0.0, %v2025
        %v2027 = vpop.f32.mrf.mxu0
        %v2028 = vpop.f32.mrf.mxu0
        %v2029 = vpop.f32.mrf.mxu0
        %2030 = vdwg.mxu0
        %2032 = vrot.lane.b32.xlu0 %v1934, 8
        %v2033 = vpop.permute.xlu0 %2032
        %2036 = vrot.lane.b32.xlu0 %v1980, 16
        %v2037 = vpop.permute.xlu0 %2036
        %2040 = vrot.lane.b32.xlu0 %v2026, 24
        %v2041 = vpop.permute.xlu0 %2040
        %v2043 = vsel %vm1609, %v1888, %v2033
        %vm2044 = vcmask 130048
        %v2045 = vsel %vm2044, %v2043, %v2037
        %vm2046 = vcmask 195584
        %v2047 = vsel %vm2046, %v2045, %v2041
        %v2048 = vpack.c.bf16 %v2047, %v2047
        %v2049 = vld [vmem:[%s9] sm:$0xf]
        %v2050 = vld [vmem:[%s9 + $0x4] sm:$0xf]
        %v2051 = vld [vmem:[%s9 + $0x8] sm:$0xf]
        %v2052 = vld [vmem:[%s9 + $0xc] sm:$0xf]
        %v2053 = vld [vmem:[%s10] sm:$0x1]
        %v2055 = vlaneseq
        %v2056 = vshrl.u32 %v2055, 7
        %v2057 = vsub.s32 0, %v2056
        %v2058 = vrot.slane %v2053, %v2057
        %v2064 = vunpack.c.l.b16 %v2049
        %v2065 = vunpack.c.l.b16 %v2050
        %v2066 = vunpack.c.l.b16 %v2051
        %v2067 = vunpack.c.l.b16 %v2052
        %v2068 = vpack.c.b16 %v2065, %v2064
        %v2069 = vpack.c.b16 %v2067, %v2066
        %v2073 = vsel %vm1407, %v2048, 0
        %2075 = vmatprep.subr.bf16.mxu0 0
        %2076 = vmatpush1.bf16.msra.mxu0 0
        %2077 = vmatprep.subr.bf16.mxu0 0
        %2078 = vmatpush1.bf16.msra.mxu0 0
        %2079 = vmatprep.subr.bf16.mxu0 0
        %2080 = vmatpush1.bf16.msra.mxu0 0
        %2081 = vmatprep.subr.bf16.mxu0 0
        %2082 = vmatpush1.bf16.msra.mxu0 0
        %2083 = vmatprep.subr.bf16.mxu0 0
        %2084 = vmatpush1.bf16.msra.mxu0 0
        %2085 = vmatprep.subr.bf16.mxu0 0
        %2086 = vmatpush1.bf16.msra.mxu0 0
        %2087 = vmatprep.subr.bf16.mxu0 0
        %2088 = vmatpush1.bf16.msra.mxu0 %v2069
        %2089 = vmatprep.subr.bf16.mxu0 0
        %2090 = vmatpush1.bf16.msra.mxu0 %v2068
        %2091 = vmatprep.subr.bf16.mxu0 0
        %2092 = vmatpush2.bf16.msra.mxu0 0
        %2093 = vmatprep.subr.bf16.mxu0 0
        %2094 = vmatpush2.bf16.msra.mxu0 0
        %2095 = vmatprep.subr.bf16.mxu0 0
        %2096 = vmatpush2.bf16.msra.mxu0 0
        %2097 = vmatprep.subr.bf16.mxu0 0
        %2098 = vmatpush2.bf16.msra.mxu0 0
        %2099 = vmatprep.subr.bf16.mxu0 0
        %2100 = vmatpush2.bf16.msra.mxu0 0
        %2101 = vmatprep.subr.bf16.mxu0 0
        %2102 = vmatpush2.bf16.msra.mxu0 0
        %2103 = vmatprep.subr.bf16.mxu0 0
        %2104 = vmatpush2.bf16.msra.mxu0 0
        %2105 = vmatprep.subr.bf16.mxu0 0
        %2106 = vmatpush2.bf16.msra.mxu0 0
        %2107 = vmatprep.mubr.bf16.mxu0 0
        %2108 = vmatmul.mubr.bf16.gmra.mxu0 %v2073
        %v2109 = vpop.f32.mrf.mxu0
        %v2110 = vadd.f32 %v2058, %v2109
        %v2111 = vpop.f32.mrf.mxu0
        %v2112 = vpop.f32.mrf.mxu0
        %v2113 = vpop.f32.mrf.mxu0
        %2114 = vdwg.mxu0
        %v2115 = vadd.f32 %v1243, %v2110
        %v2116 = vld [vmem:[%s11] sm:$0x1]
        %v2117 = vld [vmem:[%s12] sm:$0x1]
        %v2118 = vsel %vm1407, %v2115, 0.0
        %2119 = vadd.xlane.f32.xlu0 %v2118
        %v2120 = vpop.xlane.xlu0 %2119
        %v2121 = vrcp.pop 32.0
        %v2122 = vmul.f32 %v2120, %v2121
        %v2123 = vsub.f32 %v2115, %v2122
        %v2124 = vmul.f32 %v2123, %v2123
        %v2125 = vsel %vm1407, %v2124, 0.0
        %2126 = vadd.xlane.f32.xlu0 %v2125
        %v2127 = vpop.xlane.xlu0 %2126
        %v2128 = vmul.f32 %v2127, %v2121
        %v2129 = vadd.f32 %v2128, 1e-12
        %v2130 = vrsqrt.pop %v2129
        %v2131 = vmul.f32 %v2123, %v2130
        %v2133 = vlaneseq
        %v2134 = vshrl.u32 %v2133, 7
        %v2135 = vsub.s32 0, %v2134
        %v2136 = vrot.slane %v2116, %v2135
        %v2138 = vmul.f32 %v2136, %v2131
        %v2140 = vlaneseq
        %v2141 = vshrl.u32 %v2140, 7
        %v2142 = vsub.s32 0, %v2141
        %v2143 = vrot.slane %v2117, %v2142
        %v2145 = vadd.f32 %v2138, %v2143
        %v2146 = vpack.c.bf16 %v2145, %v2145
        %v2147 = vld [vmem:[%s13] sm:$0xf]
        %v2148 = vld [vmem:[%s13 + $0x4] sm:$0xf]
        %v2149 = vld [vmem:[%s13 + $0x8] sm:$0xf]
        %v2150 = vld [vmem:[%s13 + $0xc] sm:$0xf]
        %v2151 = vld [vmem:[%s14] sm:$0x1]
        %v2153 = vlaneseq
        %v2154 = vshrl.u32 %v2153, 7
        %v2155 = vsub.s32 0, %v2154
        %v2156 = vrot.slane %v2151, %v2155
        %v2162 = vunpack.c.l.b16 %v2147
        %v2163 = vunpack.c.l.b16 %v2148
        %v2164 = vunpack.c.l.b16 %v2149
        %v2165 = vunpack.c.l.b16 %v2150
        %v2166 = vpack.c.b16 %v2163, %v2162
        %v2167 = vpack.c.b16 %v2165, %v2164
        %v2171 = vsel %vm1407, %v2146, 0
        %2173 = vmatprep.subr.bf16.mxu0 0
        %2174 = vmatpush1.bf16.msra.mxu0 0
        %2175 = vmatprep.subr.bf16.mxu0 0
        %2176 = vmatpush1.bf16.msra.mxu0 0
        %2177 = vmatprep.subr.bf16.mxu0 0
        %2178 = vmatpush1.bf16.msra.mxu0 0
        %2179 = vmatprep.subr.bf16.mxu0 0
        %2180 = vmatpush1.bf16.msra.mxu0 0
        %2181 = vmatprep.subr.bf16.mxu0 0
        %2182 = vmatpush1.bf16.msra.mxu0 0
        %2183 = vmatprep.subr.bf16.mxu0 0
        %2184 = vmatpush1.bf16.msra.mxu0 0
        %2185 = vmatprep.subr.bf16.mxu0 0
        %2186 = vmatpush1.bf16.msra.mxu0 %v2167
        %2187 = vmatprep.subr.bf16.mxu0 0
        %2188 = vmatpush1.bf16.msra.mxu0 %v2166
        %2189 = vmatprep.subr.bf16.mxu0 0
        %2190 = vmatpush2.bf16.msra.mxu0 0
        %2191 = vmatprep.subr.bf16.mxu0 0
        %2192 = vmatpush2.bf16.msra.mxu0 0
        %2193 = vmatprep.subr.bf16.mxu0 0
        %2194 = vmatpush2.bf16.msra.mxu0 0
        %2195 = vmatprep.subr.bf16.mxu0 0
        %2196 = vmatpush2.bf16.msra.mxu0 0
        %2197 = vmatprep.subr.bf16.mxu0 0
        %2198 = vmatpush2.bf16.msra.mxu0 0
        %2199 = vmatprep.subr.bf16.mxu0 0
        %2200 = vmatpush2.bf16.msra.mxu0 0
        %2201 = vmatprep.subr.bf16.mxu0 0
        %2202 = vmatpush2.bf16.msra.mxu0 0
        %2203 = vmatprep.subr.bf16.mxu0 0
        %2204 = vmatpush2.bf16.msra.mxu0 0
        %2205 = vmatprep.mubr.bf16.mxu0 0
        %2206 = vmatmul.mubr.bf16.gmra.mxu0 %v2171
        %v2207 = vpop.f32.mrf.mxu0
        %v2208 = vadd.f32 %v2156, %v2207
        %v2209 = vpop.f32.mrf.mxu0
        %v2210 = vpop.f32.mrf.mxu0
        %v2211 = vpop.f32.mrf.mxu0
        %2212 = vdwg.mxu0
        %v2213 = vmul.f32 %v2208, 0.5
        %v2214 = vmul.f32 %v2208, 0.70710677
        %v2215 = verf.f32.pop %v2214
        %v2216 = vadd.f32 %v2215, 1.0
        %v2217 = vmul.f32 %v2213, %v2216
        %v2218 = vpack.c.bf16 %v2217, %v2217
        %v2219 = vld [vmem:[%s15] sm:$0xf]
        %v2220 = vld [vmem:[%s15 + $0x4] sm:$0xf]
        %v2221 = vld [vmem:[%s15 + $0x8] sm:$0xf]
        %v2222 = vld [vmem:[%s15 + $0xc] sm:$0xf]
        %v2223 = vld [vmem:[%s15 + $0x10] sm:$0xf]
        %v2224 = vld [vmem:[%s15 + $0x14] sm:$0xf]
        %v2225 = vld [vmem:[%s15 + $0x18] sm:$0xf]
        %v2226 = vld [vmem:[%s15 + $0x1c] sm:$0xf]
        %v2227 = vld [vmem:[%s16] sm:$0x1]
        %v2229 = vlaneseq
        %v2230 = vshrl.u32 %v2229, 7
        %v2231 = vsub.s32 0, %v2230
        %v2232 = vrot.slane %v2227, %v2231
        %v2242 = vunpack.c.l.b16 %v2219
        %v2243 = vunpack.c.l.b16 %v2220
        %v2244 = vunpack.c.l.b16 %v2221
        %v2245 = vunpack.c.l.b16 %v2222
        %v2246 = vunpack.c.l.b16 %v2223
        %v2247 = vunpack.c.l.b16 %v2224
        %v2248 = vunpack.c.l.b16 %v2225
        %v2249 = vunpack.c.l.b16 %v2226
        %v2250 = vpack.c.b16 %v2243, %v2242
        %v2251 = vpack.c.b16 %v2245, %v2244
        %v2252 = vpack.c.b16 %v2247, %v2246
        %v2253 = vpack.c.b16 %v2249, %v2248
        %vm2258 = vcmask 523264
        %v2260 = vsel %vm2258, %v2218, 0
        %2262 = vmatprep.subr.bf16.mxu0 0
        %2263 = vmatpush1.bf16.msra.mxu0 0
        %2264 = vmatprep.subr.bf16.mxu0 0
        %2265 = vmatpush1.bf16.msra.mxu0 0
        %2266 = vmatprep.subr.bf16.mxu0 0
        %2267 = vmatpush1.bf16.msra.mxu0 0
        %2268 = vmatprep.subr.bf16.mxu0 0
        %2269 = vmatpush1.bf16.msra.mxu0 0
        %2270 = vmatprep.subr.bf16.mxu0 0
        %2271 = vmatpush1.bf16.msra.mxu0 %v2253
        %2272 = vmatprep.subr.bf16.mxu0 0
        %2273 = vmatpush1.bf16.msra.mxu0 %v2252
        %2274 = vmatprep.subr.bf16.mxu0 0
        %2275 = vmatpush1.bf16.msra.mxu0 %v2251
        %2276 = vmatprep.subr.bf16.mxu0 0
        %2277 = vmatpush1.bf16.msra.mxu0 %v2250
        %2278 = vmatprep.subr.bf16.mxu0 0
        %2279 = vmatpush2.bf16.msra.mxu0 0
        %2280 = vmatprep.subr.bf16.mxu0 0
        %2281 = vmatpush2.bf16.msra.mxu0 0
        %2282 = vmatprep.subr.bf16.mxu0 0
        %2283 = vmatpush2.bf16.msra.mxu0 0
        %2284 = vmatprep.subr.bf16.mxu0 0
        %2285 = vmatpush2.bf16.msra.mxu0 0
        %2286 = vmatprep.subr.bf16.mxu0 0
        %2287 = vmatpush2.bf16.msra.mxu0 0
        %2288 = vmatprep.subr.bf16.mxu0 0
        %2289 = vmatpush2.bf16.msra.mxu0 0
        %2290 = vmatprep.subr.bf16.mxu0 0
        %2291 = vmatpush2.bf16.msra.mxu0 0
        %2292 = vmatprep.subr.bf16.mxu0 0
        %2293 = vmatpush2.bf16.msra.mxu0 0
        %2294 = vmatprep.mubr.bf16.mxu0 0
        %2295 = vmatmul.mubr.bf16.gmra.mxu0 %v2260
        %v2296 = vpop.f32.mrf.mxu0
        %v2297 = vadd.f32 %v2232, %v2296
        %v2298 = vpop.f32.mrf.mxu0
        %v2299 = vpop.f32.mrf.mxu0
        %v2300 = vpop.f32.mrf.mxu0
        %2301 = vdwg.mxu0
        %v2302 = vadd.f32 %v2145, %v2297
        %v2303 = vld [vmem:[%s17] sm:$0x1]
        %v2304 = vld [vmem:[%s18] sm:$0x1]
        %v2305 = vsel %vm1407, %v2302, 0.0
        %2306 = vadd.xlane.f32.xlu0 %v2305
        %v2307 = vpop.xlane.xlu0 %2306
        %v2308 = vmul.f32 %v2307, %v2121
        %v2309 = vsub.f32 %v2302, %v2308
        %v2310 = vmul.f32 %v2309, %v2309
        %v2311 = vsel %vm1407, %v2310, 0.0
        %2312 = vadd.xlane.f32.xlu0 %v2311
        %v2313 = vpop.xlane.xlu0 %2312
        %v2314 = vmul.f32 %v2313, %v2121
        %v2315 = vadd.f32 %v2314, 1e-12
        %v2316 = vrsqrt.pop %v2315
        %v2317 = vmul.f32 %v2309, %v2316
        %v2319 = vlaneseq
        %v2320 = vshrl.u32 %v2319, 7
        %v2321 = vsub.s32 0, %v2320
        %v2322 = vrot.slane %v2303, %v2321
        %v2324 = vmul.f32 %v2322, %v2317
        %v2326 = vlaneseq
        %v2327 = vshrl.u32 %v2326, 7
        %v2328 = vsub.s32 0, %v2327
        %v2329 = vrot.slane %v2304, %v2328
        %v2331 = vadd.f32 %v2324, %v2329
        %2332 = vst.msk [vmem:[%s639] sm:$0xff] %vm1407, %v2331
        %s2333 = sand.u32 %s471, 1
        %s2334 = scalar_lea.sflag [#allocation5], %s2333
        %s2335 = sand.u32 %s471, 1
        %s2336 = smul.addr %s2335, 8
        %s2337 = scalar_lea.vmem [#allocation4], %s2336
        // Predicated region
        $region101: #{tpu_custom_call.1} parent=95 // pred_check
          %p2338 = pneg %p481
        $region102: #{tpu_custom_call.1} parent=95 // pred_check_branch
          %2340 = sbr.rel (%p2338) target = $region104
        $region103: #{tpu_custom_call.1} parent=95 // pred_region
          %s2342 = ssub.s32 128, 128
          %2343 = vsyncadd %s2334, %s2342
          %s2344 = sadd.s32 %s38, %s37
          %s2345 = smul.addr %s2344, 128
          %s2346 = scalar_lea.hbm %s19, %s2345
          %s2348 = sshll.u32 %s2337, 4
          %s2349 = int_to_ptr.vmem [resolvable:$true] %s2348
          %2351 = dma.vmem_to_hbm [thread:$0]  %s2349, 128, %s2346, %s2334
        $region104: #{tpu_custom_call.1} parent=95 // pred_fallthru
          _
      $region96: #{tpu_custom_call.1} parent=5 // pred_fallthru
        _
      %p2352 = scmp.le.s32.totalorder 2, %s28
      // Predicated region
      $region105: #{tpu_custom_call.1} parent=5 // pred_check
        %p2353 = pneg %p2352
      $region106: #{tpu_custom_call.1} parent=5 // pred_check_branch
        %2355 = sbr.rel (%p2353) target = $region108
      $region107: #{tpu_custom_call.1} parent=5 // pred_region
        %s2356 = ssub.s32 %s28, 2
        // Predicated region
        $region109: #{tpu_custom_call.1} parent=107 // pred_check
          %p2357 = pneg %p487
        $region110: #{tpu_custom_call.1} parent=107 // pred_check_branch
          %2359 = sbr.rel (%p2357) target = $region112
        $region111: #{tpu_custom_call.1} parent=107 // pred_region
          %s2360 = sand.u32 %s472, 1
          %s2361 = scalar_lea.sflag [#allocation5], %s2360
          %s2362 = sand.u32 %s472, 1
          %s2363 = smul.addr %s2362, 8
          %s2364 = scalar_lea.vmem [#allocation4], %s2363
          %2365 = dma.done %s2361, 128
        $region112: #{tpu_custom_call.1} parent=107 // pred_fallthru
          _
      $region108: #{tpu_custom_call.1} parent=5 // pred_fallthru
        _
    $region6: #{tpu_custom_call.1} parent=1 // loop_footer
      %s32 = sadd.s32 1, %s28
    $region7: #{tpu_custom_call.1} parent=1 // loop_footer_branch
      %27 = sbr.rel target = $region3
    $region8: #{tpu_custom_call.1} parent=1 // loop_exit
      _
    %2366 = vsyncpa [#allocation5], 1
    %s2367 = scalar_lea.sflag [#allocation5], 1
    %2368 = vsyncpa %s2367, 1

</llo_original>
